<compile_context>
chip_gen: v6e
topology: v6e:2x2x1
jax: 0.10.0
libtpu: 0.0.40
codegen_flags: <defaults>
</compile_context>

<pallas_src>
import math
import functools

import jax
import jax.numpy as jnp
from jax.experimental import pallas as pl
from jax.experimental.pallas import tpu as pltpu


# ----------------------------- kernel helpers -----------------------------

def _layer_norm(v, gamma, beta, eps=1e-5):
    mu = jnp.mean(v, axis=-1, keepdims=True)
    var = jnp.mean((v - mu) ** 2, axis=-1, keepdims=True)
    return (v - mu) * jax.lax.rsqrt(var + eps) * gamma + beta


def _gelu_exact(x):
    # torch.nn.GELU() default == exact erf-based GELU (keep in f32)
    return 0.5 * x * (1.0 + jax.lax.erf(x * (1.0 / math.sqrt(2.0))))


def _split_heads(m, n_head, d_head, col_offset=0):
    # (rows, *) bf16 -> (H, rows, dh) from static lane slices
    return jnp.stack(
        [m[:, col_offset + h * d_head: col_offset + (h + 1) * d_head]
         for h in range(n_head)], axis=0)


def _attention_core(q_h, k_h, v_h, wo_h_ref, n_head):
    # q_h already scaled by 1/sqrt(d_head); all operands bf16, acc f32.
    f32 = jnp.float32
    bf16 = jnp.bfloat16
    s = jnp.einsum('hqd,hkd->hqk', q_h, k_h, preferred_element_type=f32)
    s = s - jnp.max(s, axis=-1, keepdims=True)
    p = jnp.exp(s)
    p = p * pl.reciprocal(jnp.sum(p, axis=-1, keepdims=True), approx=True)
    o_h = jnp.einsum('hqk,hkd->hqd', p.astype(bf16), v_h,
                     preferred_element_type=f32).astype(bf16)
    # output projection accumulated per head (no lane concatenate)
    attn = jnp.dot(o_h[0], wo_h_ref[0], preferred_element_type=f32)
    for h in range(1, n_head):
        attn = attn + jnp.dot(o_h[h], wo_h_ref[h], preferred_element_type=f32)
    return attn


def _mlp_core(x1, g2, b2, w1_ref, w2_ref):
    f32, bf16 = jnp.float32, jnp.bfloat16
    x1n = _layer_norm(x1, g2, b2).astype(bf16)
    h1 = jnp.dot(x1n, w1_ref[...], preferred_element_type=f32)   # (rows, 4D) f32
    h1 = _gelu_exact(h1).astype(bf16)
    return jnp.dot(h1, w2_ref[...], preferred_element_type=f32)  # (rows, D) f32


# ----------------------------- Pallas kernels -----------------------------

def _block_kernel_fused(
    x_ref,              # (1, T, D)
    wqkv_ref,           # (D, 3D) bf16 = [Wq^T | Wk^T | Wv^T]
    wo_h_ref,           # (H, dh, D) bf16
    ln1_g_ref, ln1_b_ref,   # (1, D) f32
    w1_ref,             # (D, 4D) bf16
    w2_ref,             # (4D, D) bf16
    ln2_g_ref, ln2_b_ref,   # (1, D) f32
    o_ref,              # (1, T, D)
    *, n_head: int, d_head: int,
):
    f32, bf16 = jnp.float32, jnp.bfloat16
    D = n_head * d_head

    x = x_ref[0].astype(f32)                                    # (T, D)
    xn = _layer_norm(x, ln1_g_ref[0], ln1_b_ref[0]).astype(bf16)

    qkv = jnp.dot(xn, wqkv_ref[...], preferred_element_type=f32)  # (T, 3D) f32
    scale = 1.0 / math.sqrt(d_head)
    q = (qkv[:, :D] * scale).astype(bf16)                        # (T, D)
    kv = qkv[:, D:].astype(bf16)                                 # (T, 2D)

    q_h = _split_heads(q, n_head, d_head)
    k_h = _split_heads(kv, n_head, d_head)
    v_h = _split_heads(kv, n_head, d_head, col_offset=D)

    x1 = x + _attention_core(q_h, k_h, v_h, wo_h_ref, n_head)    # first residual
    h2 = _mlp_core(x1, ln2_g_ref[0], ln2_b_ref[0], w1_ref, w2_ref)
    o_ref[0] = (x1 + h2).astype(o_ref.dtype)                     # second residual


def _block_kernel_tiled(
    xq_ref,             # (1, TQ, D) query-tile rows of x
    xkv_ref,            # (1, T,  D) full sequence (for K/V)
    wq_ref,             # (D, D)  bf16
    wkv_ref,            # (D, 2D) bf16 = [Wk^T | Wv^T]
    wo_h_ref,           # (H, dh, D) bf16
    ln1_g_ref, ln1_b_ref,
    w1_ref, w2_ref,
    ln2_g_ref, ln2_b_ref,
    o_ref,              # (1, TQ, D)
    *, n_head: int, d_head: int,
):
    f32, bf16 = jnp.float32, jnp.bfloat16
    D = n_head * d_head

    xq = xq_ref[0].astype(f32)                                   # (TQ, D)
    xkv = xkv_ref[0].astype(f32)                                 # (T,  D)
    g1, b1 = ln1_g_ref[0], ln1_b_ref[0]
    xq_n = _layer_norm(xq, g1, b1).astype(bf16)
    xkv_n = _layer_norm(xkv, g1, b1).astype(bf16)

    scale = 1.0 / math.sqrt(d_head)
    q = (jnp.dot(xq_n, wq_ref[...], preferred_element_type=f32) * scale).astype(bf16)
    kv = jnp.dot(xkv_n, wkv_ref[...], preferred_element_type=f32).astype(bf16)

    q_h = _split_heads(q, n_head, d_head)
    k_h = _split_heads(kv, n_head, d_head)
    v_h = _split_heads(kv, n_head, d_head, col_offset=D)

    x1 = xq + _attention_core(q_h, k_h, v_h, wo_h_ref, n_head)   # first residual
    h2 = _mlp_core(x1, ln2_g_ref[0], ln2_b_ref[0], w1_ref, w2_ref)
    o_ref[0] = (x1 + h2).astype(o_ref.dtype)                     # second residual


# ----------------------------- wrapper -----------------------------

def _pick_query_tile(T: int) -> int:
    if T <= 512:
        return T
    for cand in (512, 384, 256, 128):
        if T % cand == 0:
            return cand
    return T


def residual_attention_block(x, params, *, n_head: int, query_tile=None):
    """x: (B, T, D) float32. params: dict of weights matching the torch module."""
    B, T, D = x.shape
    d_head = D // n_head
    n_mlp = 4 * D
    bf16, f32 = jnp.bfloat16, jnp.float32

    # torch Linear stores (out, in); forward is x @ W.T -> kernel gets (in, out).
    wq_t = params["wq"].T.astype(bf16)                            # (D, D)
    wk_t = params["wk"].T.astype(bf16)
    wv_t = params["wv"].T.astype(bf16)
    wo_h = params["wo"].T.reshape(n_head, d_head, D).astype(bf16)  # (H, dh, D)
    w1_t = params["w1"].T.astype(bf16)                            # (D, 4D)
    w2_t = params["w2"].T.astype(bf16)                            # (4D, D)
    ln1_g = params["ln1_g"].reshape(1, D).astype(f32)
    ln1_b = params["ln1_b"].reshape(1, D).astype(f32)
    ln2_g = params["ln2_g"].reshape(1, D).astype(f32)
    ln2_b = params["ln2_b"].reshape(1, D).astype(f32)

    tq = query_tile if query_tile is not None else _pick_query_tile(T)
    assert T % tq == 0
    n_qt = T // tq

    # VMEM budget: resident bf16 weights + f32 activation tiles, headroom for v7x.
    weight_bytes = 2 * (4 * D * D + 2 * D * n_mlp)
    act_bytes = 4 * (8 * T * D + 3 * n_head * tq * T + 2 * tq * n_mlp)
    vmem_limit = int(min(max(2 * weight_bytes + 2 * act_bytes, 32 << 20), 56 << 20))

    if n_qt == 1:
        # whole sequence in one tile: fused QKV projection, single LayerNorm pass
        def fixed(shape):
            rank = len(shape)
            return pl.BlockSpec(shape, lambda b, _r=rank: (0,) * _r)

        wqkv_t = jnp.concatenate([wq_t, wk_t, wv_t], axis=1)      # (D, 3D)
        kernel = functools.partial(_block_kernel_fused, n_head=n_head, d_head=d_head)
        grid_spec = pltpu.PrefetchScalarGridSpec(
            num_scalar_prefetch=0,
            grid=(B,),
            in_specs=[
                pl.BlockSpec((1, T, D), lambda b: (b, 0, 0)),     # x
                fixed((D, 3 * D)),                                # [Wq|Wk|Wv]^T
                fixed((n_head, d_head, D)),                       # Wo^T head-major
                fixed((1, D)), fixed((1, D)),                     # ln1 gamma, beta
                fixed((D, n_mlp)), fixed((n_mlp, D)),             # W1^T, W2^T
                fixed((1, D)), fixed((1, D)),                     # ln2 gamma, beta
            ],
            out_specs=pl.BlockSpec((1, T, D), lambda b: (b, 0, 0)),
        )
        args = (x, wqkv_t, wo_h, ln1_g, ln1_b, w1_t, w2_t, ln2_g, ln2_b)
        dims = ("parallel",)
    else:
        def fixed(shape):
            rank = len(shape)
            return pl.BlockSpec(shape, lambda b, t, _r=rank: (0,) * _r)

        wkv_t = jnp.concatenate([wk_t, wv_t], axis=1)             # (D, 2D)
        kernel = functools.partial(_block_kernel_tiled, n_head=n_head, d_head=d_head)
        grid_spec = pltpu.PrefetchScalarGridSpec(
            num_scalar_prefetch=0,
            grid=(B, n_qt),
            in_specs=[
                pl.BlockSpec((1, tq, D), lambda b, t: (b, t, 0)),  # x (query tile)
                pl.BlockSpec((1, T, D), lambda b, t: (b, 0, 0)),   # x (full, for K/V)
                fixed((D, D)),                                     # Wq^T
                fixed((D, 2 * D)),                                 # [Wk|Wv]^T
                fixed((n_head, d_head, D)),                        # Wo^T head-major
                fixed((1, D)), fixed((1, D)),                      # ln1 gamma, beta
                fixed((D, n_mlp)), fixed((n_mlp, D)),              # W1^T, W2^T
                fixed((1, D)), fixed((1, D)),                      # ln2 gamma, beta
            ],
            out_specs=pl.BlockSpec((1, tq, D), lambda b, t: (b, t, 0)),
        )
        args = (x, x, wq_t, wkv_t, wo_h, ln1_g, ln1_b, w1_t, w2_t, ln2_g, ln2_b)
        dims = ("parallel", "parallel")

    return pl.pallas_call(
        kernel,
        out_shape=jax.ShapeDtypeStruct((B, T, D), x.dtype),
        grid_spec=grid_spec,
        compiler_params=pltpu.CompilerParams(
            dimension_semantics=dims,
            vmem_limit_bytes=vmem_limit,
        ),
    )(*args)


# ----------------------------- pure-JAX reference (f32) -----------------------------

def reference(x, params, *, n_head: int):
    B, T, D = x.shape
    dh = D // n_head

    def ln(v, g, b):
        mu = jnp.mean(v, axis=-1, keepdims=True)
        var = jnp.mean((v - mu) ** 2, axis=-1, keepdims=True)
        return (v - mu) / jnp.sqrt(var + 1e-5) * g + b

    xn = ln(x, params["ln1_g"], params["ln1_b"])
    q = xn @ params["wq"].T
    k = xn @ params["wk"].T
    v = xn @ params["wv"].T
    q = q.reshape(B, T, n_head, dh).transpose(0, 2, 1, 3)
    k = k.reshape(B, T, n_head, dh).transpose(0, 2, 1, 3)
    v = v.reshape(B, T, n_head, dh).transpose(0, 2, 1, 3)
    s = jnp.einsum("bhtd,bhsd->bhts", q, k) / math.sqrt(dh)
    p = jax.nn.softmax(s, axis=-1)
    wv = jnp.einsum("bhts,bhsd->bhtd", p, v).transpose(0, 2, 1, 3).reshape(B, T, D)
    x1 = x + wv @ params["wo"].T

    xn2 = ln(x1, params["ln2_g"], params["ln2_b"])
    h = jax.nn.gelu(xn2 @ params["w1"].T, approximate=False)
    return x1 + h @ params["w2"].T


# ----------------------------- main -----------------------------

if __name__ == "__main__":
    B, T, D, H = 2, 8, 32, 4     # batch, seq, n_state, n_head
    n_mlp = 4 * D

    key = jax.random.PRNGKey(0)
    keys = jax.random.split(key, 8)
    scale = 0.05
    params = {
        "wq": scale * jax.random.normal(keys[0], (D, D), jnp.float32),
        "wk": scale * jax.random.normal(keys[1], (D, D), jnp.float32),
        "wv": scale * jax.random.normal(keys[2], (D, D), jnp.float32),
        "wo": scale * jax.random.normal(keys[3], (D, D), jnp.float32),
        "w1": scale * jax.random.normal(keys[4], (n_mlp, D), jnp.float32),
        "w2": scale * jax.random.normal(keys[5], (D, n_mlp), jnp.float32),
        # torch LayerNorm default init: weight=1, bias=0
        "ln1_g": jnp.ones((D,), jnp.float32),
        "ln1_b": jnp.zeros((D,), jnp.float32),
        "ln2_g": jnp.ones((D,), jnp.float32),
        "ln2_b": jnp.zeros((D,), jnp.float32),
    }

    # --- path 1: single-tile (whole sequence resident) ---
    x = jax.random.normal(keys[6], (B, T, D), jnp.float32)
    out = jax.block_until_ready(residual_attention_block(x, params, n_head=H))
    ref = reference(x, params, n_head=H)
    assert jnp.allclose(out, ref, atol=2e-2, rtol=2e-2), (
        f"fused path max err {jnp.max(jnp.abs(out - ref))}")

    # --- path 2: query-tiled (exercised with a forced small tile) ---
    T2 = 16
    x2 = jax.random.normal(keys[7], (B, T2, D), jnp.float32)
    out2 = jax.block_until_ready(
        residual_attention_block(x2, params, n_head=H, query_tile=8))
    ref2 = reference(x2, params, n_head=H)
    assert jnp.allclose(out2, ref2, atol=2e-2, rtol=2e-2), (
        f"tiled path max err {jnp.max(jnp.abs(out2 - ref2))}")

    print("KERNEL_OK")
</pallas_src>

<mosaic_0001>
module attributes {stable_mosaic.version = 11 : i64} {
  func.func @_block_kernel_fused(%arg0: i32, %arg1: memref<1x8x32xf32, #tpu.memory_space<vmem>>, %arg2: memref<32x96xbf16, #tpu.memory_space<vmem>>, %arg3: memref<4x8x32xbf16, #tpu.memory_space<vmem>>, %arg4: memref<1x32xf32, #tpu.memory_space<vmem>>, %arg5: memref<1x32xf32, #tpu.memory_space<vmem>>, %arg6: memref<32x128xbf16, #tpu.memory_space<vmem>>, %arg7: memref<128x32xbf16, #tpu.memory_space<vmem>>, %arg8: memref<1x32xf32, #tpu.memory_space<vmem>>, %arg9: memref<1x32xf32, #tpu.memory_space<vmem>>, %arg10: memref<1x8x32xf32, #tpu.memory_space<vmem>>) attributes {dimension_semantics = [#tpu.dimension_semantics<parallel>], iteration_bounds = array<i64: 2>, scalar_prefetch = 0 : i64, scratch_operands = 0 : i64, tpu.core_type = #tpu.core_type<tc>, window_params = [{transform_indices = @transform_0, window_bounds = array<i64: 1, 8, 32>}, {pipeline_mode = #tpu.pipeline_mode<synchronous>, transform_indices = @transform_1, window_bounds = array<i64: 32, 96>}, {pipeline_mode = #tpu.pipeline_mode<synchronous>, transform_indices = @transform_2, window_bounds = array<i64: 4, 8, 32>}, {pipeline_mode = #tpu.pipeline_mode<synchronous>, transform_indices = @transform_3, window_bounds = array<i64: 1, 32>}, {pipeline_mode = #tpu.pipeline_mode<synchronous>, transform_indices = @transform_4, window_bounds = array<i64: 1, 32>}, {pipeline_mode = #tpu.pipeline_mode<synchronous>, transform_indices = @transform_5, window_bounds = array<i64: 32, 128>}, {pipeline_mode = #tpu.pipeline_mode<synchronous>, transform_indices = @transform_6, window_bounds = array<i64: 128, 32>}, {pipeline_mode = #tpu.pipeline_mode<synchronous>, transform_indices = @transform_7, window_bounds = array<i64: 1, 32>}, {pipeline_mode = #tpu.pipeline_mode<synchronous>, transform_indices = @transform_8, window_bounds = array<i64: 1, 32>}, {transform_indices = @transform_9, window_bounds = array<i64: 1, 8, 32>}]} {
    %c0 = arith.constant 0 : index
    %c0_0 = arith.constant 0 : index
    %c0_1 = arith.constant 0 : index
    %0 = vector.load %arg1[%c0, %c0_0, %c0_1] : memref<1x8x32xf32, #tpu.memory_space<vmem>>, vector<1x8x32xf32>
    %1 = vector.shape_cast %0 : vector<1x8x32xf32> to vector<8x32xf32>
    %c0_2 = arith.constant 0 : index
    %c0_3 = arith.constant 0 : index
    %2 = vector.load %arg4[%c0_2, %c0_3] : memref<1x32xf32, #tpu.memory_space<vmem>>, vector<1x32xf32>
    %3 = vector.shape_cast %2 : vector<1x32xf32> to vector<32xf32>
    %c0_4 = arith.constant 0 : index
    %c0_5 = arith.constant 0 : index
    %4 = vector.load %arg5[%c0_4, %c0_5] : memref<1x32xf32, #tpu.memory_space<vmem>>, vector<1x32xf32>
    %5 = vector.shape_cast %4 : vector<1x32xf32> to vector<32xf32>
    %cst = arith.constant dense<0.000000e+00> : vector<8xf32>
    %6 = vector.multi_reduction <add>, %1, %cst [1] : vector<8x32xf32> to vector<8xf32>
    %7 = vector.shape_cast %6 : vector<8xf32> to vector<8x1xf32>
    %cst_6 = arith.constant 3.200000e+01 : f32
    %8 = vector.broadcast %cst_6 : f32 to vector<8x1xf32>
    %9 = arith.divf %7, %8 : vector<8x1xf32>
    %10 = vector.broadcast %9 : vector<8x1xf32> to vector<8x32xf32>
    %11 = arith.subf %1, %10 : vector<8x32xf32>
    %12 = arith.mulf %11, %11 : vector<8x32xf32>
    %cst_7 = arith.constant dense<0.000000e+00> : vector<8xf32>
    %13 = vector.multi_reduction <add>, %12, %cst_7 [1] : vector<8x32xf32> to vector<8xf32>
    %14 = vector.shape_cast %13 : vector<8xf32> to vector<8x1xf32>
    %cst_8 = arith.constant 3.200000e+01 : f32
    %15 = vector.broadcast %cst_8 : f32 to vector<8x1xf32>
    %16 = arith.divf %14, %15 : vector<8x1xf32>
    %17 = vector.broadcast %9 : vector<8x1xf32> to vector<8x32xf32>
    %18 = arith.subf %1, %17 : vector<8x32xf32>
    %cst_9 = arith.constant 9.99999974E-6 : f32
    %19 = vector.broadcast %cst_9 : f32 to vector<8x1xf32>
    %20 = arith.addf %16, %19 : vector<8x1xf32>
    %21 = math.rsqrt %20 : vector<8x1xf32>
    %22 = vector.broadcast %21 : vector<8x1xf32> to vector<8x32xf32>
    %23 = arith.mulf %18, %22 : vector<8x32xf32>
    %24 = vector.shape_cast %3 : vector<32xf32> to vector<1x32xf32>
    %25 = vector.broadcast %24 : vector<1x32xf32> to vector<8x32xf32>
    %26 = arith.mulf %23, %25 : vector<8x32xf32>
    %27 = vector.shape_cast %5 : vector<32xf32> to vector<1x32xf32>
    %28 = vector.broadcast %27 : vector<1x32xf32> to vector<8x32xf32>
    %29 = arith.addf %26, %28 : vector<8x32xf32>
    %30 = arith.truncf %29 : vector<8x32xf32> to vector<8x32xbf16>
    %c0_10 = arith.constant 0 : index
    %c0_11 = arith.constant 0 : index
    %31 = vector.load %arg2[%c0_10, %c0_11] : memref<32x96xbf16, #tpu.memory_space<vmem>>, vector<32x96xbf16>
    %cst_12 = arith.constant dense<0.000000e+00> : vector<8x96xf32>
    %32 = tpu.matmul %30, %31, %cst_12 {dimension_numbers = #tpu.dot_dimension_numbers<[1], [0], [0], [1], [0, 0, 1, 1], [], []>} : vector<8x32xbf16>, vector<32x96xbf16>, vector<8x96xf32> -> vector<8x96xf32>
    %33 = vector.extract_strided_slice %32 {offsets = [0, 0], sizes = [8, 32], strides = [1, 1]} : vector<8x96xf32> to vector<8x32xf32>
    %cst_13 = arith.constant 0.353553385 : f32
    %34 = vector.broadcast %cst_13 : f32 to vector<8x32xf32>
    %35 = arith.mulf %33, %34 : vector<8x32xf32>
    %36 = arith.truncf %35 : vector<8x32xf32> to vector<8x32xbf16>
    %37 = vector.extract_strided_slice %32 {offsets = [0, 32], sizes = [8, 64], strides = [1, 1]} : vector<8x96xf32> to vector<8x64xf32>
    %38 = arith.truncf %37 : vector<8x64xf32> to vector<8x64xbf16>
    %39 = vector.extract_strided_slice %36 {offsets = [0, 0], sizes = [8, 8], strides = [1, 1]} : vector<8x32xbf16> to vector<8x8xbf16>
    %40 = vector.extract_strided_slice %36 {offsets = [0, 8], sizes = [8, 8], strides = [1, 1]} : vector<8x32xbf16> to vector<8x8xbf16>
    %41 = vector.extract_strided_slice %36 {offsets = [0, 16], sizes = [8, 8], strides = [1, 1]} : vector<8x32xbf16> to vector<8x8xbf16>
    %42 = vector.extract_strided_slice %36 {offsets = [0, 24], sizes = [8, 8], strides = [1, 1]} : vector<8x32xbf16> to vector<8x8xbf16>
    %43 = vector.shape_cast %39 : vector<8x8xbf16> to vector<1x8x8xbf16>
    %44 = vector.shape_cast %40 : vector<8x8xbf16> to vector<1x8x8xbf16>
    %45 = vector.shape_cast %41 : vector<8x8xbf16> to vector<1x8x8xbf16>
    %46 = vector.shape_cast %42 : vector<8x8xbf16> to vector<1x8x8xbf16>
    %47 = tpu.concatenate %43, %44, %45, %46 in 0 : vector<1x8x8xbf16>, vector<1x8x8xbf16>, vector<1x8x8xbf16>, vector<1x8x8xbf16> -> vector<4x8x8xbf16>
    %48 = vector.extract_strided_slice %38 {offsets = [0, 0], sizes = [8, 8], strides = [1, 1]} : vector<8x64xbf16> to vector<8x8xbf16>
    %49 = vector.extract_strided_slice %38 {offsets = [0, 8], sizes = [8, 8], strides = [1, 1]} : vector<8x64xbf16> to vector<8x8xbf16>
    %50 = vector.extract_strided_slice %38 {offsets = [0, 16], sizes = [8, 8], strides = [1, 1]} : vector<8x64xbf16> to vector<8x8xbf16>
    %51 = vector.extract_strided_slice %38 {offsets = [0, 24], sizes = [8, 8], strides = [1, 1]} : vector<8x64xbf16> to vector<8x8xbf16>
    %52 = vector.shape_cast %48 : vector<8x8xbf16> to vector<1x8x8xbf16>
    %53 = vector.shape_cast %49 : vector<8x8xbf16> to vector<1x8x8xbf16>
    %54 = vector.shape_cast %50 : vector<8x8xbf16> to vector<1x8x8xbf16>
    %55 = vector.shape_cast %51 : vector<8x8xbf16> to vector<1x8x8xbf16>
    %56 = tpu.concatenate %52, %53, %54, %55 in 0 : vector<1x8x8xbf16>, vector<1x8x8xbf16>, vector<1x8x8xbf16>, vector<1x8x8xbf16> -> vector<4x8x8xbf16>
    %57 = vector.extract_strided_slice %38 {offsets = [0, 32], sizes = [8, 8], strides = [1, 1]} : vector<8x64xbf16> to vector<8x8xbf16>
    %58 = vector.extract_strided_slice %38 {offsets = [0, 40], sizes = [8, 8], strides = [1, 1]} : vector<8x64xbf16> to vector<8x8xbf16>
    %59 = vector.extract_strided_slice %38 {offsets = [0, 48], sizes = [8, 8], strides = [1, 1]} : vector<8x64xbf16> to vector<8x8xbf16>
    %60 = vector.extract_strided_slice %38 {offsets = [0, 56], sizes = [8, 8], strides = [1, 1]} : vector<8x64xbf16> to vector<8x8xbf16>
    %61 = vector.shape_cast %57 : vector<8x8xbf16> to vector<1x8x8xbf16>
    %62 = vector.shape_cast %58 : vector<8x8xbf16> to vector<1x8x8xbf16>
    %63 = vector.shape_cast %59 : vector<8x8xbf16> to vector<1x8x8xbf16>
    %64 = vector.shape_cast %60 : vector<8x8xbf16> to vector<1x8x8xbf16>
    %65 = tpu.concatenate %61, %62, %63, %64 in 0 : vector<1x8x8xbf16>, vector<1x8x8xbf16>, vector<1x8x8xbf16>, vector<1x8x8xbf16> -> vector<4x8x8xbf16>
    "tpu.trace_start"() <{level = 10 : i32, message = "hqd,hkd->hqk"}> : () -> ()
    %cst_14 = arith.constant dense<0.000000e+00> : vector<4x8x8xf32>
    %66 = tpu.matmul %47, %56, %cst_14 {dimension_numbers = #tpu.dot_dimension_numbers<[2], [2], [1], [1], [0, 0, 0, 1, 1, 1], [0], [0]>} : vector<4x8x8xbf16>, vector<4x8x8xbf16>, vector<4x8x8xf32> -> vector<4x8x8xf32>
    "tpu.trace_stop"() : () -> ()
    %cst_15 = arith.constant dense<0xFF800000> : vector<4x8xf32>
    %67 = vector.multi_reduction <maximumf>, %66, %cst_15 [2] : vector<4x8x8xf32> to vector<4x8xf32>
    %68 = vector.shape_cast %67 : vector<4x8xf32> to vector<4x8x1xf32>
    %69 = vector.broadcast %68 : vector<4x8x1xf32> to vector<4x8x8xf32>
    %70 = arith.subf %66, %69 : vector<4x8x8xf32>
    %71 = math.exp %70 : vector<4x8x8xf32>
    %cst_16 = arith.constant dense<0.000000e+00> : vector<4x8xf32>
    %72 = vector.multi_reduction <add>, %71, %cst_16 [2] : vector<4x8x8xf32> to vector<4x8xf32>
    %73 = vector.shape_cast %72 : vector<4x8xf32> to vector<4x8x1xf32>
    %74 = tpu.reciprocal %73 {approx = true} : vector<4x8x1xf32> -> vector<4x8x1xf32>
    %75 = vector.broadcast %74 : vector<4x8x1xf32> to vector<4x8x8xf32>
    %76 = arith.mulf %71, %75 : vector<4x8x8xf32>
    %77 = arith.truncf %76 : vector<4x8x8xf32> to vector<4x8x8xbf16>
    "tpu.trace_start"() <{level = 10 : i32, message = "hqk,hkd->hqd"}> : () -> ()
    %cst_17 = arith.constant dense<0.000000e+00> : vector<4x8x8xf32>
    %78 = tpu.matmul %77, %65, %cst_17 {dimension_numbers = #tpu.dot_dimension_numbers<[2], [1], [1], [2], [0, 0, 0, 1, 1, 2], [0], [0]>} : vector<4x8x8xbf16>, vector<4x8x8xbf16>, vector<4x8x8xf32> -> vector<4x8x8xf32>
    "tpu.trace_stop"() : () -> ()
    %79 = arith.truncf %78 : vector<4x8x8xf32> to vector<4x8x8xbf16>
    %80 = vector.extract_strided_slice %79 {offsets = [0, 0, 0], sizes = [1, 8, 8], strides = [1, 1, 1]} : vector<4x8x8xbf16> to vector<1x8x8xbf16>
    %81 = vector.shape_cast %80 : vector<1x8x8xbf16> to vector<8x8xbf16>
    %c0_18 = arith.constant 0 : index
    %c0_19 = arith.constant 0 : index
    %c0_20 = arith.constant 0 : index
    %82 = vector.load %arg3[%c0_18, %c0_19, %c0_20] : memref<4x8x32xbf16, #tpu.memory_space<vmem>>, vector<1x8x32xbf16>
    %83 = vector.shape_cast %82 : vector<1x8x32xbf16> to vector<8x32xbf16>
    %cst_21 = arith.constant dense<0.000000e+00> : vector<8x32xf32>
    %84 = tpu.matmul %81, %83, %cst_21 {dimension_numbers = #tpu.dot_dimension_numbers<[1], [0], [0], [1], [0, 0, 1, 1], [], []>} : vector<8x8xbf16>, vector<8x32xbf16>, vector<8x32xf32> -> vector<8x32xf32>
    %85 = vector.extract_strided_slice %79 {offsets = [1, 0, 0], sizes = [1, 8, 8], strides = [1, 1, 1]} : vector<4x8x8xbf16> to vector<1x8x8xbf16>
    %86 = vector.shape_cast %85 : vector<1x8x8xbf16> to vector<8x8xbf16>
    %c1 = arith.constant 1 : index
    %c0_22 = arith.constant 0 : index
    %c0_23 = arith.constant 0 : index
    %87 = vector.load %arg3[%c1, %c0_22, %c0_23] : memref<4x8x32xbf16, #tpu.memory_space<vmem>>, vector<1x8x32xbf16>
    %88 = vector.shape_cast %87 : vector<1x8x32xbf16> to vector<8x32xbf16>
    %cst_24 = arith.constant dense<0.000000e+00> : vector<8x32xf32>
    %89 = tpu.matmul %86, %88, %cst_24 {dimension_numbers = #tpu.dot_dimension_numbers<[1], [0], [0], [1], [0, 0, 1, 1], [], []>} : vector<8x8xbf16>, vector<8x32xbf16>, vector<8x32xf32> -> vector<8x32xf32>
    %90 = arith.addf %84, %89 : vector<8x32xf32>
    %91 = vector.extract_strided_slice %79 {offsets = [2, 0, 0], sizes = [1, 8, 8], strides = [1, 1, 1]} : vector<4x8x8xbf16> to vector<1x8x8xbf16>
    %92 = vector.shape_cast %91 : vector<1x8x8xbf16> to vector<8x8xbf16>
    %c2 = arith.constant 2 : index
    %c0_25 = arith.constant 0 : index
    %c0_26 = arith.constant 0 : index
    %93 = vector.load %arg3[%c2, %c0_25, %c0_26] : memref<4x8x32xbf16, #tpu.memory_space<vmem>>, vector<1x8x32xbf16>
    %94 = vector.shape_cast %93 : vector<1x8x32xbf16> to vector<8x32xbf16>
    %cst_27 = arith.constant dense<0.000000e+00> : vector<8x32xf32>
    %95 = tpu.matmul %92, %94, %cst_27 {dimension_numbers = #tpu.dot_dimension_numbers<[1], [0], [0], [1], [0, 0, 1, 1], [], []>} : vector<8x8xbf16>, vector<8x32xbf16>, vector<8x32xf32> -> vector<8x32xf32>
    %96 = arith.addf %90, %95 : vector<8x32xf32>
    %97 = vector.extract_strided_slice %79 {offsets = [3, 0, 0], sizes = [1, 8, 8], strides = [1, 1, 1]} : vector<4x8x8xbf16> to vector<1x8x8xbf16>
    %98 = vector.shape_cast %97 : vector<1x8x8xbf16> to vector<8x8xbf16>
    %c3 = arith.constant 3 : index
    %c0_28 = arith.constant 0 : index
    %c0_29 = arith.constant 0 : index
    %99 = vector.load %arg3[%c3, %c0_28, %c0_29] : memref<4x8x32xbf16, #tpu.memory_space<vmem>>, vector<1x8x32xbf16>
    %100 = vector.shape_cast %99 : vector<1x8x32xbf16> to vector<8x32xbf16>
    %cst_30 = arith.constant dense<0.000000e+00> : vector<8x32xf32>
    %101 = tpu.matmul %98, %100, %cst_30 {dimension_numbers = #tpu.dot_dimension_numbers<[1], [0], [0], [1], [0, 0, 1, 1], [], []>} : vector<8x8xbf16>, vector<8x32xbf16>, vector<8x32xf32> -> vector<8x32xf32>
    %102 = arith.addf %96, %101 : vector<8x32xf32>
    %103 = arith.addf %1, %102 : vector<8x32xf32>
    %c0_31 = arith.constant 0 : index
    %c0_32 = arith.constant 0 : index
    %104 = vector.load %arg8[%c0_31, %c0_32] : memref<1x32xf32, #tpu.memory_space<vmem>>, vector<1x32xf32>
    %105 = vector.shape_cast %104 : vector<1x32xf32> to vector<32xf32>
    %c0_33 = arith.constant 0 : index
    %c0_34 = arith.constant 0 : index
    %106 = vector.load %arg9[%c0_33, %c0_34] : memref<1x32xf32, #tpu.memory_space<vmem>>, vector<1x32xf32>
    %107 = vector.shape_cast %106 : vector<1x32xf32> to vector<32xf32>
    %cst_35 = arith.constant dense<0.000000e+00> : vector<8xf32>
    %108 = vector.multi_reduction <add>, %103, %cst_35 [1] : vector<8x32xf32> to vector<8xf32>
    %109 = vector.shape_cast %108 : vector<8xf32> to vector<8x1xf32>
    %cst_36 = arith.constant 3.200000e+01 : f32
    %110 = vector.broadcast %cst_36 : f32 to vector<8x1xf32>
    %111 = arith.divf %109, %110 : vector<8x1xf32>
    %112 = vector.broadcast %111 : vector<8x1xf32> to vector<8x32xf32>
    %113 = arith.subf %103, %112 : vector<8x32xf32>
    %114 = arith.mulf %113, %113 : vector<8x32xf32>
    %cst_37 = arith.constant dense<0.000000e+00> : vector<8xf32>
    %115 = vector.multi_reduction <add>, %114, %cst_37 [1] : vector<8x32xf32> to vector<8xf32>
    %116 = vector.shape_cast %115 : vector<8xf32> to vector<8x1xf32>
    %cst_38 = arith.constant 3.200000e+01 : f32
    %117 = vector.broadcast %cst_38 : f32 to vector<8x1xf32>
    %118 = arith.divf %116, %117 : vector<8x1xf32>
    %119 = vector.broadcast %111 : vector<8x1xf32> to vector<8x32xf32>
    %120 = arith.subf %103, %119 : vector<8x32xf32>
    %cst_39 = arith.constant 9.99999974E-6 : f32
    %121 = vector.broadcast %cst_39 : f32 to vector<8x1xf32>
    %122 = arith.addf %118, %121 : vector<8x1xf32>
    %123 = math.rsqrt %122 : vector<8x1xf32>
    %124 = vector.broadcast %123 : vector<8x1xf32> to vector<8x32xf32>
    %125 = arith.mulf %120, %124 : vector<8x32xf32>
    %126 = vector.shape_cast %105 : vector<32xf32> to vector<1x32xf32>
    %127 = vector.broadcast %126 : vector<1x32xf32> to vector<8x32xf32>
    %128 = arith.mulf %125, %127 : vector<8x32xf32>
    %129 = vector.shape_cast %107 : vector<32xf32> to vector<1x32xf32>
    %130 = vector.broadcast %129 : vector<1x32xf32> to vector<8x32xf32>
    %131 = arith.addf %128, %130 : vector<8x32xf32>
    %132 = arith.truncf %131 : vector<8x32xf32> to vector<8x32xbf16>
    %c0_40 = arith.constant 0 : index
    %c0_41 = arith.constant 0 : index
    %133 = vector.load %arg6[%c0_40, %c0_41] : memref<32x128xbf16, #tpu.memory_space<vmem>>, vector<32x128xbf16>
    %cst_42 = arith.constant dense<0.000000e+00> : vector<8x128xf32>
    %134 = tpu.matmul %132, %133, %cst_42 {dimension_numbers = #tpu.dot_dimension_numbers<[1], [0], [0], [1], [0, 0, 1, 1], [], []>} : vector<8x32xbf16>, vector<32x128xbf16>, vector<8x128xf32> -> vector<8x128xf32>
    %cst_43 = arith.constant 5.000000e-01 : f32
    %135 = vector.broadcast %cst_43 : f32 to vector<8x128xf32>
    %136 = arith.mulf %135, %134 : vector<8x128xf32>
    %cst_44 = arith.constant 0.707106769 : f32
    %137 = vector.broadcast %cst_44 : f32 to vector<8x128xf32>
    %138 = arith.mulf %134, %137 : vector<8x128xf32>
    %139 = math.erf %138 : vector<8x128xf32>
    %cst_45 = arith.constant 1.000000e+00 : f32
    %140 = vector.broadcast %cst_45 : f32 to vector<8x128xf32>
    %141 = arith.addf %140, %139 : vector<8x128xf32>
    %142 = arith.mulf %136, %141 : vector<8x128xf32>
    %143 = arith.truncf %142 : vector<8x128xf32> to vector<8x128xbf16>
    %c0_46 = arith.constant 0 : index
    %c0_47 = arith.constant 0 : index
    %144 = vector.load %arg7[%c0_46, %c0_47] : memref<128x32xbf16, #tpu.memory_space<vmem>>, vector<128x32xbf16>
    %cst_48 = arith.constant dense<0.000000e+00> : vector<8x32xf32>
    %145 = tpu.matmul %143, %144, %cst_48 {dimension_numbers = #tpu.dot_dimension_numbers<[1], [0], [0], [1], [0, 0, 1, 1], [], []>} : vector<8x128xbf16>, vector<128x32xbf16>, vector<8x32xf32> -> vector<8x32xf32>
    %146 = arith.addf %103, %145 : vector<8x32xf32>
    %c0_49 = arith.constant 0 : index
    %c0_50 = arith.constant 0 : index
    %c0_51 = arith.constant 0 : index
    %147 = vector.load %arg10[%c0_49, %c0_50, %c0_51] : memref<1x8x32xf32, #tpu.memory_space<vmem>>, vector<1x8x32xf32>
    %148 = vector.shape_cast %147 : vector<1x8x32xf32> to vector<8x32xf32>
    %149 = vector.shape_cast %146 : vector<8x32xf32> to vector<1x8x32xf32>
    tpu.vector_store %arg10[%c0_49, %c0_50, %c0_51], %149 {strides = array<i32>} : memref<1x8x32xf32, #tpu.memory_space<vmem>>, vector<1x8x32xf32>,
    return
  }
  func.func @transform_0(%arg0: i32) -> (i32, i32, i32) {
    %c0_i32 = arith.constant 0 : i32
    %c0_i32_0 = arith.constant 0 : i32
    %c0_i32_1 = arith.constant 0 : i32
    return %arg0, %c0_i32, %c0_i32_0 : i32, i32, i32
  }
  func.func @transform_1(%arg0: i32) -> (i32, i32) {
    %c0_i32 = arith.constant 0 : i32
    %c0_i32_0 = arith.constant 0 : i32
    %c0_i32_1 = arith.constant 0 : i32
    return %c0_i32, %c0_i32_0 : i32, i32
  }
  func.func @transform_2(%arg0: i32) -> (i32, i32, i32) {
    %c0_i32 = arith.constant 0 : i32
    %c0_i32_0 = arith.constant 0 : i32
    %c0_i32_1 = arith.constant 0 : i32
    %c0_i32_2 = arith.constant 0 : i32
    return %c0_i32, %c0_i32_0, %c0_i32_1 : i32, i32, i32
  }
  func.func @transform_3(%arg0: i32) -> (i32, i32) {
    %c0_i32 = arith.constant 0 : i32
    %c0_i32_0 = arith.constant 0 : i32
    %c0_i32_1 = arith.constant 0 : i32
    return %c0_i32, %c0_i32_0 : i32, i32
  }
  func.func @transform_4(%arg0: i32) -> (i32, i32) {
    %c0_i32 = arith.constant 0 : i32
    %c0_i32_0 = arith.constant 0 : i32
    %c0_i32_1 = arith.constant 0 : i32
    return %c0_i32, %c0_i32_0 : i32, i32
  }
  func.func @transform_5(%arg0: i32) -> (i32, i32) {
    %c0_i32 = arith.constant 0 : i32
    %c0_i32_0 = arith.constant 0 : i32
    %c0_i32_1 = arith.constant 0 : i32
    return %c0_i32, %c0_i32_0 : i32, i32
  }
  func.func @transform_6(%arg0: i32) -> (i32, i32) {
    %c0_i32 = arith.constant 0 : i32
    %c0_i32_0 = arith.constant 0 : i32
    %c0_i32_1 = arith.constant 0 : i32
    return %c0_i32, %c0_i32_0 : i32, i32
  }
  func.func @transform_7(%arg0: i32) -> (i32, i32) {
    %c0_i32 = arith.constant 0 : i32
    %c0_i32_0 = arith.constant 0 : i32
    %c0_i32_1 = arith.constant 0 : i32
    return %c0_i32, %c0_i32_0 : i32, i32
  }
  func.func @transform_8(%arg0: i32) -> (i32, i32) {
    %c0_i32 = arith.constant 0 : i32
    %c0_i32_0 = arith.constant 0 : i32
    %c0_i32_1 = arith.constant 0 : i32
    return %c0_i32, %c0_i32_0 : i32, i32
  }
  func.func @transform_9(%arg0: i32) -> (i32, i32, i32) {
    %c0_i32 = arith.constant 0 : i32
    %c0_i32_0 = arith.constant 0 : i32
    %c0_i32_1 = arith.constant 0 : i32
    return %arg0, %c0_i32, %c0_i32_0 : i32, i32, i32
  }
}

</mosaic_0001>

<llo_original>
// kernel: tpu_custom_call.1
$region0: #{tpu_custom_call.1}
  #allocation0 [shape = 'u32[]', space=smem, size = 0x4, offset = 0x4, fixed_abs, tag = 'smem constant byte address 0x4 - core index']
  #allocation1 [shape = 'u32[144,128]{1,0:T(1,128)}', space=vmem, size = 0x12000, scoped, tag = 'internal scratch']
  %s0 = inlined_call_operand.vmem [shape: f32[2,8,32], index: 0, kind: input, shape index: {}]
  %s1 = inlined_call_operand.vmem [shape: bf16[32,96], index: 1, kind: input, shape index: {}]
  %s2 = inlined_call_operand.vmem [shape: bf16[4,8,32], index: 2, kind: input, shape index: {}]
  %s3 = inlined_call_operand.vmem [shape: f32[1,32], index: 3, kind: input, shape index: {}]
  %s4 = inlined_call_operand.vmem [shape: f32[1,32], index: 4, kind: input, shape index: {}]
  %s5 = inlined_call_operand.vmem [shape: bf16[32,128], index: 5, kind: input, shape index: {}]
  %s6 = inlined_call_operand.vmem [shape: bf16[128,32], index: 6, kind: input, shape index: {}]
  %s7 = inlined_call_operand.vmem [shape: f32[1,32], index: 7, kind: input, shape index: {}]
  %s8 = inlined_call_operand.vmem [shape: f32[1,32], index: 8, kind: input, shape index: {}]
  %s9 = inlined_call_operand.hbm [shape: f32[2,8,32], index: 9, kind: output, shape index: {}]
  %s10 = sld [smem:[#allocation0]]
  $region69: #{tpu_custom_call.1} parent=0
    _
  %s12 = ssub.s32 1, %s10
  %s13 = scalar_select 0, %s12, %s10
  $region1: #{tpu_custom_call.1} parent=0
    #allocation2 [shape = 'u8[8192]{0}', space=vmem, size = 0x2000, scoped, tag = 'output window, operand 0']
    #allocation3 [shape = 's32[2]{0}', space=sflag, size = 0x8, scoped, tag = 'scoped memory for tpu_custom_call.1']
    %14 = vsyncpa [#allocation3], 0
    %s15 = scalar_lea.sflag [#allocation3], 1
    %16 = vsyncpa %s15, 0
    loop: start=0, step=1, limit=4
    $region2: #{tpu_custom_call.1} parent=1 // loop_pre_header
      _
    $region3: #{tpu_custom_call.1} parent=1 // loop_header
      %s18 = sphi 0, %s22
      %p19 = scmp.ge.s32.totalorder %s18, 4
      %s28 = sphi 0, %s30
      %s31 = sphi 0, %s28
      %s32 = sphi 0, %s31
      %s48 = sphi 0, %s32
      %s52 = sphi 0, %s52
      %s54 = sphi 0, %s52
      %s55 = sphi 0, %s54
      %s69 = sphi 0, %s55
      %s73 = sphi 0, %s73
      %s75 = sphi 0, %s73
      %s76 = sphi 0, %s75
      %s90 = sphi 0, %s76
      %s94 = sphi 0, %s94
      %s96 = sphi 0, %s94
      %s97 = sphi 0, %s96
      %s111 = sphi 0, %s97
      %s115 = sphi 0, %s115
      %s117 = sphi 0, %s115
      %s118 = sphi 0, %s117
      %s132 = sphi 0, %s118
      %s136 = sphi 0, %s136
      %s138 = sphi 0, %s136
      %s139 = sphi 0, %s138
      %s153 = sphi 0, %s139
      %s157 = sphi 0, %s157
      %s159 = sphi 0, %s157
      %s160 = sphi 0, %s159
      %s174 = sphi 0, %s160
      %s178 = sphi 0, %s178
      %s180 = sphi 0, %s178
      %s181 = sphi 0, %s180
      %s195 = sphi 0, %s181
      %s199 = sphi 0, %s199
      %s201 = sphi 0, %s199
      %s202 = sphi 0, %s201
      %s216 = sphi 0, %s202
      %s222 = sphi 0, %s224
      %s225 = sphi 0, %s222
      %s226 = sphi 0, %s225
      %s242 = sphi 0, %s226
    $region4: #{tpu_custom_call.1} parent=1 // loop_header_branch
      %21 = sbr.rel (%p19) target = $region8
    $region5: #{tpu_custom_call.1} parent=1 // loop_body
      %s23 = ssub.s32 %s18, 1
      %s24 = ssub.s32 %s18, 2
      %s25 = sadd.s32 %s18, 1
      %s26 = ssub.s32 %s18, %s25
      %p27 = scmp.eq.s32.totalorder %s26, 0
      %s29 = sadd.s32 %s28, 1
      %s30 = scalar_select %p27, %s28, %s29
      %p33 = pneg %p27
      %p34 = scmp.eq.s32.totalorder %s18, 1
      %p35 = por %p33, %p34
      %p36 = scmp.ne.s32.totalorder %s28, %s31
      %p37 = scmp.eq.s32.totalorder %s18, 0
      %p38 = por %p36, %p37
      %p39 = scmp.ne.s32.totalorder %s28, %s31
      %p40 = scmp.eq.s32.totalorder %s23, 1
      %p41 = por %p39, %p40
      %p42 = scmp.ne.s32.totalorder %s31, %s32
      %p43 = scmp.eq.s32.totalorder %s23, 0
      %p44 = por %p42, %p43
      %p45 = scmp.ne.s32.totalorder %s31, %s32
      %p46 = scmp.eq.s32.totalorder %s24, 1
      %p47 = por %p45, %p46
      %p49 = scmp.ne.s32.totalorder %s32, %s48
      %p50 = scmp.eq.s32.totalorder %s24, 0
      %p51 = por %p49, %p50
      %s53 = sadd.s32 %s52, 1
      %p56 = scmp.eq.s32.totalorder %s18, 1
      %p57 = scmp.ne.s32.totalorder %s52, %s54
      %p58 = scmp.eq.s32.totalorder %s18, 0
      %p59 = por %p57, %p58
      %p60 = scmp.ne.s32.totalorder %s52, %s54
      %p61 = scmp.eq.s32.totalorder %s23, 1
      %p62 = por %p60, %p61
      %p63 = scmp.ne.s32.totalorder %s54, %s55
      %p64 = scmp.eq.s32.totalorder %s23, 0
      %p65 = por %p63, %p64
      %p66 = scmp.ne.s32.totalorder %s54, %s55
      %p67 = scmp.eq.s32.totalorder %s24, 1
      %p68 = por %p66, %p67
      %p70 = scmp.ne.s32.totalorder %s55, %s69
      %p71 = scmp.eq.s32.totalorder %s24, 0
      %p72 = por %p70, %p71
      %s74 = sadd.s32 %s73, 1
      %p77 = scmp.eq.s32.totalorder %s18, 1
      %p78 = scmp.ne.s32.totalorder %s73, %s75
      %p79 = scmp.eq.s32.totalorder %s18, 0
      %p80 = por %p78, %p79
      %p81 = scmp.ne.s32.totalorder %s73, %s75
      %p82 = scmp.eq.s32.totalorder %s23, 1
      %p83 = por %p81, %p82
      %p84 = scmp.ne.s32.totalorder %s75, %s76
      %p85 = scmp.eq.s32.totalorder %s23, 0
      %p86 = por %p84, %p85
      %p87 = scmp.ne.s32.totalorder %s75, %s76
      %p88 = scmp.eq.s32.totalorder %s24, 1
      %p89 = por %p87, %p88
      %p91 = scmp.ne.s32.totalorder %s76, %s90
      %p92 = scmp.eq.s32.totalorder %s24, 0
      %p93 = por %p91, %p92
      %s95 = sadd.s32 %s94, 1
      %p98 = scmp.eq.s32.totalorder %s18, 1
      %p99 = scmp.ne.s32.totalorder %s94, %s96
      %p100 = scmp.eq.s32.totalorder %s18, 0
      %p101 = por %p99, %p100
      %p102 = scmp.ne.s32.totalorder %s94, %s96
      %p103 = scmp.eq.s32.totalorder %s23, 1
      %p104 = por %p102, %p103
      %p105 = scmp.ne.s32.totalorder %s96, %s97
      %p106 = scmp.eq.s32.totalorder %s23, 0
      %p107 = por %p105, %p106
      %p108 = scmp.ne.s32.totalorder %s96, %s97
      %p109 = scmp.eq.s32.totalorder %s24, 1
      %p110 = por %p108, %p109
      %p112 = scmp.ne.s32.totalorder %s97, %s111
      %p113 = scmp.eq.s32.totalorder %s24, 0
      %p114 = por %p112, %p113
      %s116 = sadd.s32 %s115, 1
      %p119 = scmp.eq.s32.totalorder %s18, 1
      %p120 = scmp.ne.s32.totalorder %s115, %s117
      %p121 = scmp.eq.s32.totalorder %s18, 0
      %p122 = por %p120, %p121
      %p123 = scmp.ne.s32.totalorder %s115, %s117
      %p124 = scmp.eq.s32.totalorder %s23, 1
      %p125 = por %p123, %p124
      %p126 = scmp.ne.s32.totalorder %s117, %s118
      %p127 = scmp.eq.s32.totalorder %s23, 0
      %p128 = por %p126, %p127
      %p129 = scmp.ne.s32.totalorder %s117, %s118
      %p130 = scmp.eq.s32.totalorder %s24, 1
      %p131 = por %p129, %p130
      %p133 = scmp.ne.s32.totalorder %s118, %s132
      %p134 = scmp.eq.s32.totalorder %s24, 0
      %p135 = por %p133, %p134
      %s137 = sadd.s32 %s136, 1
      %p140 = scmp.eq.s32.totalorder %s18, 1
      %p141 = scmp.ne.s32.totalorder %s136, %s138
      %p142 = scmp.eq.s32.totalorder %s18, 0
      %p143 = por %p141, %p142
      %p144 = scmp.ne.s32.totalorder %s136, %s138
      %p145 = scmp.eq.s32.totalorder %s23, 1
      %p146 = por %p144, %p145
      %p147 = scmp.ne.s32.totalorder %s138, %s139
      %p148 = scmp.eq.s32.totalorder %s23, 0
      %p149 = por %p147, %p148
      %p150 = scmp.ne.s32.totalorder %s138, %s139
      %p151 = scmp.eq.s32.totalorder %s24, 1
      %p152 = por %p150, %p151
      %p154 = scmp.ne.s32.totalorder %s139, %s153
      %p155 = scmp.eq.s32.totalorder %s24, 0
      %p156 = por %p154, %p155
      %s158 = sadd.s32 %s157, 1
      %p161 = scmp.eq.s32.totalorder %s18, 1
      %p162 = scmp.ne.s32.totalorder %s157, %s159
      %p163 = scmp.eq.s32.totalorder %s18, 0
      %p164 = por %p162, %p163
      %p165 = scmp.ne.s32.totalorder %s157, %s159
      %p166 = scmp.eq.s32.totalorder %s23, 1
      %p167 = por %p165, %p166
      %p168 = scmp.ne.s32.totalorder %s159, %s160
      %p169 = scmp.eq.s32.totalorder %s23, 0
      %p170 = por %p168, %p169
      %p171 = scmp.ne.s32.totalorder %s159, %s160
      %p172 = scmp.eq.s32.totalorder %s24, 1
      %p173 = por %p171, %p172
      %p175 = scmp.ne.s32.totalorder %s160, %s174
      %p176 = scmp.eq.s32.totalorder %s24, 0
      %p177 = por %p175, %p176
      %s179 = sadd.s32 %s178, 1
      %p182 = scmp.eq.s32.totalorder %s18, 1
      %p183 = scmp.ne.s32.totalorder %s178, %s180
      %p184 = scmp.eq.s32.totalorder %s18, 0
      %p185 = por %p183, %p184
      %p186 = scmp.ne.s32.totalorder %s178, %s180
      %p187 = scmp.eq.s32.totalorder %s23, 1
      %p188 = por %p186, %p187
      %p189 = scmp.ne.s32.totalorder %s180, %s181
      %p190 = scmp.eq.s32.totalorder %s23, 0
      %p191 = por %p189, %p190
      %p192 = scmp.ne.s32.totalorder %s180, %s181
      %p193 = scmp.eq.s32.totalorder %s24, 1
      %p194 = por %p192, %p193
      %p196 = scmp.ne.s32.totalorder %s181, %s195
      %p197 = scmp.eq.s32.totalorder %s24, 0
      %p198 = por %p196, %p197
      %s200 = sadd.s32 %s199, 1
      %p203 = scmp.eq.s32.totalorder %s18, 1
      %p204 = scmp.ne.s32.totalorder %s199, %s201
      %p205 = scmp.eq.s32.totalorder %s18, 0
      %p206 = por %p204, %p205
      %p207 = scmp.ne.s32.totalorder %s199, %s201
      %p208 = scmp.eq.s32.totalorder %s23, 1
      %p209 = por %p207, %p208
      %p210 = scmp.ne.s32.totalorder %s201, %s202
      %p211 = scmp.eq.s32.totalorder %s23, 0
      %p212 = por %p210, %p211
      %p213 = scmp.ne.s32.totalorder %s201, %s202
      %p214 = scmp.eq.s32.totalorder %s24, 1
      %p215 = por %p213, %p214
      %p217 = scmp.ne.s32.totalorder %s202, %s216
      %p218 = scmp.eq.s32.totalorder %s24, 0
      %p219 = por %p217, %p218
      %s220 = ssub.s32 %s18, %s25
      %p221 = scmp.eq.s32.totalorder %s220, 0
      %s223 = sadd.s32 %s222, 1
      %s224 = scalar_select %p221, %s222, %s223
      %p227 = pneg %p221
      %p228 = scmp.eq.s32.totalorder %s18, 1
      %p229 = por %p227, %p228
      %p230 = scmp.ne.s32.totalorder %s222, %s225
      %p231 = scmp.eq.s32.totalorder %s18, 0
      %p232 = por %p230, %p231
      %p233 = scmp.ne.s32.totalorder %s222, %s225
      %p234 = scmp.eq.s32.totalorder %s23, 1
      %p235 = por %p233, %p234
      %p236 = scmp.ne.s32.totalorder %s225, %s226
      %p237 = scmp.eq.s32.totalorder %s23, 0
      %p238 = por %p236, %p237
      %p239 = scmp.ne.s32.totalorder %s225, %s226
      %p240 = scmp.eq.s32.totalorder %s24, 1
      %p241 = por %p239, %p240
      %p243 = scmp.ne.s32.totalorder %s226, %s242
      %p244 = scmp.eq.s32.totalorder %s24, 0
      %p245 = por %p243, %p244
      %p246 = scmp.le.s32.totalorder 1, %s18
      %p247 = scmp.lt.s32.totalorder %s18, 3
      %p248 = pnand %p246, %p247
      %p249 = pneg %p248
      // Predicated region
      $region9: #{tpu_custom_call.1} parent=5 // pred_check
        _
      $region10: #{tpu_custom_call.1} parent=5 // pred_check_branch
        %251 = sbr.rel (%p248) target = $region12
      $region11: #{tpu_custom_call.1} parent=5 // pred_region
        %s252 = ssub.s32 %s18, 1
        // Predicated region
        $region13: #{tpu_custom_call.1} parent=11 // pred_check
          %p253 = pneg %p65
        $region14: #{tpu_custom_call.1} parent=11 // pred_check_branch
          %255 = sbr.rel (%p253) target = $region16
        $region15: #{tpu_custom_call.1} parent=11 // pred_region
          _
        $region16: #{tpu_custom_call.1} parent=11 // pred_fallthru
          _
        // Predicated region
        $region17: #{tpu_custom_call.1} parent=11 // pred_check
          %p256 = pneg %p86
        $region18: #{tpu_custom_call.1} parent=11 // pred_check_branch
          %258 = sbr.rel (%p256) target = $region20
        $region19: #{tpu_custom_call.1} parent=11 // pred_region
          _
        $region20: #{tpu_custom_call.1} parent=11 // pred_fallthru
          _
        // Predicated region
        $region21: #{tpu_custom_call.1} parent=11 // pred_check
          %p259 = pneg %p107
        $region22: #{tpu_custom_call.1} parent=11 // pred_check_branch
          %261 = sbr.rel (%p259) target = $region24
        $region23: #{tpu_custom_call.1} parent=11 // pred_region
          _
        $region24: #{tpu_custom_call.1} parent=11 // pred_fallthru
          _
        // Predicated region
        $region25: #{tpu_custom_call.1} parent=11 // pred_check
          %p262 = pneg %p128
        $region26: #{tpu_custom_call.1} parent=11 // pred_check_branch
          %264 = sbr.rel (%p262) target = $region28
        $region27: #{tpu_custom_call.1} parent=11 // pred_region
          _
        $region28: #{tpu_custom_call.1} parent=11 // pred_fallthru
          _
        // Predicated region
        $region29: #{tpu_custom_call.1} parent=11 // pred_check
          %p265 = pneg %p149
        $region30: #{tpu_custom_call.1} parent=11 // pred_check_branch
          %267 = sbr.rel (%p265) target = $region32
        $region31: #{tpu_custom_call.1} parent=11 // pred_region
          _
        $region32: #{tpu_custom_call.1} parent=11 // pred_fallthru
          _
        // Predicated region
        $region33: #{tpu_custom_call.1} parent=11 // pred_check
          %p268 = pneg %p170
        $region34: #{tpu_custom_call.1} parent=11 // pred_check_branch
          %270 = sbr.rel (%p268) target = $region36
        $region35: #{tpu_custom_call.1} parent=11 // pred_region
          _
        $region36: #{tpu_custom_call.1} parent=11 // pred_fallthru
          _
        // Predicated region
        $region37: #{tpu_custom_call.1} parent=11 // pred_check
          %p271 = pneg %p191
        $region38: #{tpu_custom_call.1} parent=11 // pred_check_branch
          %273 = sbr.rel (%p271) target = $region40
        $region39: #{tpu_custom_call.1} parent=11 // pred_region
          _
        $region40: #{tpu_custom_call.1} parent=11 // pred_fallthru
          _
        // Predicated region
        $region41: #{tpu_custom_call.1} parent=11 // pred_check
          %p274 = pneg %p212
        $region42: #{tpu_custom_call.1} parent=11 // pred_check_branch
          %276 = sbr.rel (%p274) target = $region44
        $region43: #{tpu_custom_call.1} parent=11 // pred_region
          _
        $region44: #{tpu_custom_call.1} parent=11 // pred_fallthru
          _
      $region12: #{tpu_custom_call.1} parent=5 // pred_fallthru
        _
      %p277 = scmp.lt.s32.totalorder %s18, 2
      // Predicated region
      $region45: #{tpu_custom_call.1} parent=5 // pred_check
        %p278 = pneg %p277
      $region46: #{tpu_custom_call.1} parent=5 // pred_check_branch
        %280 = sbr.rel (%p278) target = $region48
      $region47: #{tpu_custom_call.1} parent=5 // pred_region
        // Predicated region
        $region49: #{tpu_custom_call.1} parent=47 // pred_check
          %p281 = pneg %p38
        $region50: #{tpu_custom_call.1} parent=47 // pred_check_branch
          %283 = sbr.rel (%p281) target = $region52
        $region51: #{tpu_custom_call.1} parent=47 // pred_region
          %p284 = scmp.lt.s32.totalorder %s18, 1
          %s285 = scalar_select %p284, %s18, 1
          %s286 = smul.addr %s285, 8
          %s287 = scalar_lea.vmem %s0, %s286
        $region52: #{tpu_custom_call.1} parent=47 // pred_fallthru
          _
      $region48: #{tpu_custom_call.1} parent=5 // pred_fallthru
        _
      %p288 = scmp.le.s32.totalorder 1, %s18
      %p289 = scmp.lt.s32.totalorder %s18, 3
      %p290 = pnand %p288, %p289
      %p291 = pneg %p290
      // Predicated region
      $region53: #{tpu_custom_call.1} parent=5 // pred_check
        _
      $region54: #{tpu_custom_call.1} parent=5 // pred_check_branch
        %293 = sbr.rel (%p290) target = $region56
      $region55: #{tpu_custom_call.1} parent=5 // pred_region
        %s294 = ssub.s32 %s18, 1
        %p295 = scmp.lt.s32.totalorder %s23, 1
        %s296 = scalar_select %p295, %s23, 1
        %s297 = smul.addr %s296, 8
        %s298 = scalar_lea.vmem %s0, %s297
        %p299 = pneg %p44
        %p300 = pneg %p41
        %p301 = pneg %p65
        %p302 = pneg %p62
        %p303 = pneg %p86
        %p304 = pneg %p83
        %p305 = pneg %p107
        %p306 = pneg %p104
        %p307 = pneg %p128
        %p308 = pneg %p125
        %p309 = pneg %p149
        %p310 = pneg %p146
        %p311 = pneg %p170
        %p312 = pneg %p167
        %p313 = pneg %p191
        %p314 = pneg %p188
        %p315 = pneg %p212
        %p316 = pneg %p209
        %p317 = pneg %p238
        %p318 = pneg %p235
        %s319 = sand.u32 %s225, 1
        %s320 = scalar_lea.sflag [#allocation3], %s319
        %s321 = sand.u32 %s225, 1
        %s322 = smul.addr %s321, 8
        %s323 = scalar_lea.vmem [#allocation2], %s322
        %p324 = scmp.lt.s32.totalorder %s23, 1
        %s325 = scalar_select %p324, %s23, 1
        %s326 = smul.addr %s325, 8
        %s327 = scalar_lea.vmem %s0, %s326
        %v329 = vld [vmem:[%s327] sm:$0xff]
        %v330 = vld [vmem:[%s3] sm:$0x1]
        %v331 = vld [vmem:[%s4] sm:$0x1]
        %vm332 = vcmask 261120
        %v333 = vsel %vm332, %v329, 0.0
        %334 = vadd.xlane.f32.xlu0 %v333
        %v335 = vpop.xlane.xlu0 %334
        %v336 = vrcp.pop 32.0
        %v337 = vmul.f32 %v335, %v336
        %v338 = vsub.f32 %v329, %v337
        %v339 = vmul.f32 %v338, %v338
        %v340 = vsel %vm332, %v339, 0.0
        %341 = vadd.xlane.f32.xlu0 %v340
        %v342 = vpop.xlane.xlu0 %341
        %v343 = vmul.f32 %v342, %v336
        %v344 = vadd.f32 %v343, 1e-05
        %v345 = vrsqrt.pop %v344
        %v346 = vmul.f32 %v338, %v345
        %v348 = vlaneseq
        %v349 = vshrl.u32 %v348, 7
        %v350 = vsub.s32 0, %v349
        %v351 = vrot.slane %v330, %v350
        %v353 = vmul.f32 %v346, %v351
        %v355 = vlaneseq
        %v356 = vshrl.u32 %v355, 7
        %v357 = vsub.s32 0, %v356
        %v358 = vrot.slane %v331, %v357
        %v360 = vadd.f32 %v353, %v358
        %v361 = vpack.c.bf16 %v360, %v360
        %v362 = vld [vmem:[%s1] sm:$0xf]
        %v363 = vld [vmem:[%s1 + $0x4] sm:$0xf]
        %v364 = vld [vmem:[%s1 + $0x8] sm:$0xf]
        %v365 = vld [vmem:[%s1 + $0xc] sm:$0xf]
        %v370 = vunpack.c.l.b16 %v362
        %v371 = vunpack.c.l.b16 %v363
        %v372 = vunpack.c.l.b16 %v364
        %v373 = vunpack.c.l.b16 %v365
        %v374 = vpack.c.b16 %v371, %v370
        %v375 = vpack.c.b16 %v373, %v372
        %v379 = vsel %vm332, %v361, 0
        %381 = vmatprep.subr.bf16.mxu0 0
        %382 = vmatpush1.bf16.msra.mxu0 0
        %383 = vmatprep.subr.bf16.mxu0 0
        %384 = vmatpush1.bf16.msra.mxu0 0
        %385 = vmatprep.subr.bf16.mxu0 0
        %386 = vmatpush1.bf16.msra.mxu0 0
        %387 = vmatprep.subr.bf16.mxu0 0
        %388 = vmatpush1.bf16.msra.mxu0 0
        %389 = vmatprep.subr.bf16.mxu0 0
        %390 = vmatpush1.bf16.msra.mxu0 0
        %391 = vmatprep.subr.bf16.mxu0 0
        %392 = vmatpush1.bf16.msra.mxu0 0
        %393 = vmatprep.subr.bf16.mxu0 0
        %394 = vmatpush1.bf16.msra.mxu0 %v375
        %395 = vmatprep.subr.bf16.mxu0 0
        %396 = vmatpush1.bf16.msra.mxu0 %v374
        %397 = vmatprep.subr.bf16.mxu0 0
        %398 = vmatpush2.bf16.msra.mxu0 0
        %399 = vmatprep.subr.bf16.mxu0 0
        %400 = vmatpush2.bf16.msra.mxu0 0
        %401 = vmatprep.subr.bf16.mxu0 0
        %402 = vmatpush2.bf16.msra.mxu0 0
        %403 = vmatprep.subr.bf16.mxu0 0
        %404 = vmatpush2.bf16.msra.mxu0 0
        %405 = vmatprep.subr.bf16.mxu0 0
        %406 = vmatpush2.bf16.msra.mxu0 0
        %407 = vmatprep.subr.bf16.mxu0 0
        %408 = vmatpush2.bf16.msra.mxu0 0
        %409 = vmatprep.subr.bf16.mxu0 0
        %410 = vmatpush2.bf16.msra.mxu0 0
        %411 = vmatprep.subr.bf16.mxu0 0
        %412 = vmatpush2.bf16.msra.mxu0 0
        %413 = vmatprep.mubr.bf16.mxu0 0
        %414 = vmatmul.mubr.bf16.gmra.mxu0 %v379
        %v415 = vpop.f32.mrf.mxu0
        %v416 = vadd.f32 0.0, %v415
        %v417 = vpop.f32.mrf.mxu0
        %v418 = vpop.f32.mrf.mxu0
        %v419 = vpop.f32.mrf.mxu0
        %420 = vdwg.mxu0
        %v421 = vmul.f32 %v416, 0.35355338
        %v422 = vpack.c.bf16 %v421, %v421
        %v423 = vpack.c.bf16 %v416, %v416
        %425 = vrot.lane.b32.xlu0 %v422, 120
        %v426 = vpop.permute.xlu0 %425
        %427 = vrot.lane.b32.xlu0 %v422, 112
        %v428 = vpop.permute.xlu0 %427
        %429 = vrot.lane.b32.xlu0 %v422, 104
        %v430 = vpop.permute.xlu0 %429
        %432 = vrot.lane.b32.xlu0 %v423, 120
        %v433 = vpop.permute.xlu0 %432
        %434 = vrot.lane.b32.xlu0 %v423, 112
        %v435 = vpop.permute.xlu0 %434
        %436 = vrot.lane.b32.xlu0 %v423, 104
        %v437 = vpop.permute.xlu0 %436
        %438 = vrot.lane.b32.xlu0 %v423, 96
        %v439 = vpop.permute.xlu0 %438
        %vm440 = vcmask 64512
        %v442 = vsel %vm440, %v422, 0
        %v445 = vsel %vm440, %v439, 0
        %447 = vmatprep.subr.bf16.mxu0 0
        %448 = vmatpush1.bf16.xpose.msra.mxu0 0
        %449 = vmatprep.subr.bf16.mxu0 0
        %450 = vmatpush1.bf16.xpose.msra.mxu0 0
        %451 = vmatprep.subr.bf16.mxu0 0
        %452 = vmatpush1.bf16.xpose.msra.mxu0 0
        %453 = vmatprep.subr.bf16.mxu0 0
        %454 = vmatpush1.bf16.xpose.msra.mxu0 0
        %455 = vmatprep.subr.bf16.mxu0 0
        %456 = vmatpush1.bf16.xpose.msra.mxu0 0
        %457 = vmatprep.subr.bf16.mxu0 0
        %458 = vmatpush1.bf16.xpose.msra.mxu0 0
        %459 = vmatprep.subr.bf16.mxu0 0
        %460 = vmatpush1.bf16.xpose.msra.mxu0 0
        %461 = vmatprep.subr.bf16.mxu0 0
        %462 = vmatpush1.bf16.xpose.msra.mxu0 %v445
        %463 = vmatprep.subr.bf16.mxu0 0
        %464 = vmatpush2.bf16.xpose.msra.mxu0 0
        %465 = vmatprep.subr.bf16.mxu0 0
        %466 = vmatpush2.bf16.xpose.msra.mxu0 0
        %467 = vmatprep.subr.bf16.mxu0 0
        %468 = vmatpush2.bf16.xpose.msra.mxu0 0
        %469 = vmatprep.subr.bf16.mxu0 0
        %470 = vmatpush2.bf16.xpose.msra.mxu0 0
        %471 = vmatprep.subr.bf16.mxu0 0
        %472 = vmatpush2.bf16.xpose.msra.mxu0 0
        %473 = vmatprep.subr.bf16.mxu0 0
        %474 = vmatpush2.bf16.xpose.msra.mxu0 0
        %475 = vmatprep.subr.bf16.mxu0 0
        %476 = vmatpush2.bf16.xpose.msra.mxu0 0
        %477 = vmatprep.subr.bf16.mxu0 0
        %478 = vmatpush2.bf16.xpose.msra.mxu0 0
        %479 = vmatprep.mubr.bf16.mxu0 0
        %480 = vmatmul.mubr.bf16.gmra.mxu0 %v442
        %v481 = vpop.f32.mrf.mxu0
        %v482 = vadd.f32 0.0, %v481
        %v483 = vpop.f32.mrf.mxu0
        %v484 = vpop.f32.mrf.mxu0
        %v485 = vpop.f32.mrf.mxu0
        %486 = vdwg.mxu0
        %487 = vrot.lane.b32.xlu0 %v433, 96
        %v488 = vpop.permute.xlu0 %487
        %v490 = vsel %vm440, %v426, 0
        %v493 = vsel %vm440, %v488, 0
        %495 = vmatprep.subr.bf16.mxu0 0
        %496 = vmatpush1.bf16.xpose.msra.mxu0 0
        %497 = vmatprep.subr.bf16.mxu0 0
        %498 = vmatpush1.bf16.xpose.msra.mxu0 0
        %499 = vmatprep.subr.bf16.mxu0 0
        %500 = vmatpush1.bf16.xpose.msra.mxu0 0
        %501 = vmatprep.subr.bf16.mxu0 0
        %502 = vmatpush1.bf16.xpose.msra.mxu0 0
        %503 = vmatprep.subr.bf16.mxu0 0
        %504 = vmatpush1.bf16.xpose.msra.mxu0 0
        %505 = vmatprep.subr.bf16.mxu0 0
        %506 = vmatpush1.bf16.xpose.msra.mxu0 0
        %507 = vmatprep.subr.bf16.mxu0 0
        %508 = vmatpush1.bf16.xpose.msra.mxu0 0
        %509 = vmatprep.subr.bf16.mxu0 0
        %510 = vmatpush1.bf16.xpose.msra.mxu0 %v493
        %511 = vmatprep.subr.bf16.mxu0 0
        %512 = vmatpush2.bf16.xpose.msra.mxu0 0
        %513 = vmatprep.subr.bf16.mxu0 0
        %514 = vmatpush2.bf16.xpose.msra.mxu0 0
        %515 = vmatprep.subr.bf16.mxu0 0
        %516 = vmatpush2.bf16.xpose.msra.mxu0 0
        %517 = vmatprep.subr.bf16.mxu0 0
        %518 = vmatpush2.bf16.xpose.msra.mxu0 0
        %519 = vmatprep.subr.bf16.mxu0 0
        %520 = vmatpush2.bf16.xpose.msra.mxu0 0
        %521 = vmatprep.subr.bf16.mxu0 0
        %522 = vmatpush2.bf16.xpose.msra.mxu0 0
        %523 = vmatprep.subr.bf16.mxu0 0
        %524 = vmatpush2.bf16.xpose.msra.mxu0 0
        %525 = vmatprep.subr.bf16.mxu0 0
        %526 = vmatpush2.bf16.xpose.msra.mxu0 0
        %527 = vmatprep.mubr.bf16.mxu0 0
        %528 = vmatmul.mubr.bf16.gmra.mxu0 %v490
        %v529 = vpop.f32.mrf.mxu0
        %v530 = vadd.f32 0.0, %v529
        %v531 = vpop.f32.mrf.mxu0
        %v532 = vpop.f32.mrf.mxu0
        %v533 = vpop.f32.mrf.mxu0
        %534 = vdwg.mxu0
        %535 = vrot.lane.b32.xlu0 %v435, 96
        %v536 = vpop.permute.xlu0 %535
        %v538 = vsel %vm440, %v428, 0
        %v541 = vsel %vm440, %v536, 0
        %543 = vmatprep.subr.bf16.mxu0 0
        %544 = vmatpush1.bf16.xpose.msra.mxu0 0
        %545 = vmatprep.subr.bf16.mxu0 0
        %546 = vmatpush1.bf16.xpose.msra.mxu0 0
        %547 = vmatprep.subr.bf16.mxu0 0
        %548 = vmatpush1.bf16.xpose.msra.mxu0 0
        %549 = vmatprep.subr.bf16.mxu0 0
        %550 = vmatpush1.bf16.xpose.msra.mxu0 0
        %551 = vmatprep.subr.bf16.mxu0 0
        %552 = vmatpush1.bf16.xpose.msra.mxu0 0
        %553 = vmatprep.subr.bf16.mxu0 0
        %554 = vmatpush1.bf16.xpose.msra.mxu0 0
        %555 = vmatprep.subr.bf16.mxu0 0
        %556 = vmatpush1.bf16.xpose.msra.mxu0 0
        %557 = vmatprep.subr.bf16.mxu0 0
        %558 = vmatpush1.bf16.xpose.msra.mxu0 %v541
        %559 = vmatprep.subr.bf16.mxu0 0
        %560 = vmatpush2.bf16.xpose.msra.mxu0 0
        %561 = vmatprep.subr.bf16.mxu0 0
        %562 = vmatpush2.bf16.xpose.msra.mxu0 0
        %563 = vmatprep.subr.bf16.mxu0 0
        %564 = vmatpush2.bf16.xpose.msra.mxu0 0
        %565 = vmatprep.subr.bf16.mxu0 0
        %566 = vmatpush2.bf16.xpose.msra.mxu0 0
        %567 = vmatprep.subr.bf16.mxu0 0
        %568 = vmatpush2.bf16.xpose.msra.mxu0 0
        %569 = vmatprep.subr.bf16.mxu0 0
        %570 = vmatpush2.bf16.xpose.msra.mxu0 0
        %571 = vmatprep.subr.bf16.mxu0 0
        %572 = vmatpush2.bf16.xpose.msra.mxu0 0
        %573 = vmatprep.subr.bf16.mxu0 0
        %574 = vmatpush2.bf16.xpose.msra.mxu0 0
        %575 = vmatprep.mubr.bf16.mxu0 0
        %576 = vmatmul.mubr.bf16.gmra.mxu0 %v538
        %v577 = vpop.f32.mrf.mxu0
        %v578 = vadd.f32 0.0, %v577
        %v579 = vpop.f32.mrf.mxu0
        %v580 = vpop.f32.mrf.mxu0
        %v581 = vpop.f32.mrf.mxu0
        %582 = vdwg.mxu0
        %583 = vrot.lane.b32.xlu0 %v437, 96
        %v584 = vpop.permute.xlu0 %583
        %v586 = vsel %vm440, %v430, 0
        %v589 = vsel %vm440, %v584, 0
        %591 = vmatprep.subr.bf16.mxu0 0
        %592 = vmatpush1.bf16.xpose.msra.mxu0 0
        %593 = vmatprep.subr.bf16.mxu0 0
        %594 = vmatpush1.bf16.xpose.msra.mxu0 0
        %595 = vmatprep.subr.bf16.mxu0 0
        %596 = vmatpush1.bf16.xpose.msra.mxu0 0
        %597 = vmatprep.subr.bf16.mxu0 0
        %598 = vmatpush1.bf16.xpose.msra.mxu0 0
        %599 = vmatprep.subr.bf16.mxu0 0
        %600 = vmatpush1.bf16.xpose.msra.mxu0 0
        %601 = vmatprep.subr.bf16.mxu0 0
        %602 = vmatpush1.bf16.xpose.msra.mxu0 0
        %603 = vmatprep.subr.bf16.mxu0 0
        %604 = vmatpush1.bf16.xpose.msra.mxu0 0
        %605 = vmatprep.subr.bf16.mxu0 0
        %606 = vmatpush1.bf16.xpose.msra.mxu0 %v589
        %607 = vmatprep.subr.bf16.mxu0 0
        %608 = vmatpush2.bf16.xpose.msra.mxu0 0
        %609 = vmatprep.subr.bf16.mxu0 0
        %610 = vmatpush2.bf16.xpose.msra.mxu0 0
        %611 = vmatprep.subr.bf16.mxu0 0
        %612 = vmatpush2.bf16.xpose.msra.mxu0 0
        %613 = vmatprep.subr.bf16.mxu0 0
        %614 = vmatpush2.bf16.xpose.msra.mxu0 0
        %615 = vmatprep.subr.bf16.mxu0 0
        %616 = vmatpush2.bf16.xpose.msra.mxu0 0
        %617 = vmatprep.subr.bf16.mxu0 0
        %618 = vmatpush2.bf16.xpose.msra.mxu0 0
        %619 = vmatprep.subr.bf16.mxu0 0
        %620 = vmatpush2.bf16.xpose.msra.mxu0 0
        %621 = vmatprep.subr.bf16.mxu0 0
        %622 = vmatpush2.bf16.xpose.msra.mxu0 0
        %623 = vmatprep.mubr.bf16.mxu0 0
        %624 = vmatmul.mubr.bf16.gmra.mxu0 %v586
        %v625 = vpop.f32.mrf.mxu0
        %v626 = vadd.f32 0.0, %v625
        %v627 = vpop.f32.mrf.mxu0
        %v628 = vpop.f32.mrf.mxu0
        %v629 = vpop.f32.mrf.mxu0
        %630 = vdwg.mxu0
        %v631 = vsel %vm440, %v482, -inf
        %632 = vmax.xlane.f32.xlu0 %v631
        %v633 = vpop.xlane.xlu0 %632
        %v634 = vsel %vm440, %v530, -inf
        %635 = vmax.xlane.f32.xlu0 %v634
        %v636 = vpop.xlane.xlu0 %635
        %v637 = vsel %vm440, %v578, -inf
        %638 = vmax.xlane.f32.xlu0 %v637
        %v639 = vpop.xlane.xlu0 %638
        %v640 = vsel %vm440, %v626, -inf
        %641 = vmax.xlane.f32.xlu0 %v640
        %v642 = vpop.xlane.xlu0 %641
        %v643 = vsub.f32 %v482, %v633
        %v644 = vsub.f32 %v530, %v636
        %v645 = vsub.f32 %v578, %v639
        %v646 = vsub.f32 %v626, %v642
        %v647 = vmul.f32 %v643, 1.442695
        %v648 = vpow.pop %v647
        %v649 = vmul.f32 %v644, 1.442695
        %v650 = vpow.pop %v649
        %v651 = vmul.f32 %v645, 1.442695
        %v652 = vpow.pop %v651
        %v653 = vmul.f32 %v646, 1.442695
        %v654 = vpow.pop %v653
        %v655 = vsel %vm440, %v648, 0.0
        %656 = vadd.xlane.f32.xlu0 %v655
        %v657 = vpop.xlane.xlu0 %656
        %v658 = vsel %vm440, %v650, 0.0
        %659 = vadd.xlane.f32.xlu0 %v658
        %v660 = vpop.xlane.xlu0 %659
        %v661 = vsel %vm440, %v652, 0.0
        %662 = vadd.xlane.f32.xlu0 %v661
        %v663 = vpop.xlane.xlu0 %662
        %v664 = vsel %vm440, %v654, 0.0
        %665 = vadd.xlane.f32.xlu0 %v664
        %v666 = vpop.xlane.xlu0 %665
        %v667 = vrcp.pop %v657
        %v668 = vrcp.pop %v660
        %v669 = vrcp.pop %v663
        %v670 = vrcp.pop %v666
        %v671 = vmul.f32 %v648, %v667
        %v672 = vmul.f32 %v650, %v668
        %v673 = vmul.f32 %v652, %v669
        %v674 = vmul.f32 %v654, %v670
        %v675 = vpack.c.bf16 %v671, %v671
        %v676 = vpack.c.bf16 %v672, %v672
        %v677 = vpack.c.bf16 %v673, %v673
        %v678 = vpack.c.bf16 %v674, %v674
        %679 = vrot.lane.b32.xlu0 %v423, 64
        %v680 = vpop.permute.xlu0 %679
        %v682 = vsel %vm440, %v675, 0
        %vm684 = vcmask 1043456
        %v686 = vsel %vm684, %v680, 0
        %688 = vmatprep.subr.bf16.mxu0 0
        %689 = vmatpush1.bf16.msra.mxu0 0
        %690 = vmatprep.subr.bf16.mxu0 0
        %691 = vmatpush1.bf16.msra.mxu0 0
        %692 = vmatprep.subr.bf16.mxu0 0
        %693 = vmatpush1.bf16.msra.mxu0 0
        %694 = vmatprep.subr.bf16.mxu0 0
        %695 = vmatpush1.bf16.msra.mxu0 0
        %696 = vmatprep.subr.bf16.mxu0 0
        %697 = vmatpush1.bf16.msra.mxu0 0
        %698 = vmatprep.subr.bf16.mxu0 0
        %699 = vmatpush1.bf16.msra.mxu0 0
        %700 = vmatprep.subr.bf16.mxu0 0
        %701 = vmatpush1.bf16.msra.mxu0 0
        %702 = vmatprep.subr.bf16.mxu0 0
        %703 = vmatpush1.bf16.msra.mxu0 %v686
        %704 = vmatprep.subr.bf16.mxu0 0
        %705 = vmatpush2.bf16.msra.mxu0 0
        %706 = vmatprep.subr.bf16.mxu0 0
        %707 = vmatpush2.bf16.msra.mxu0 0
        %708 = vmatprep.subr.bf16.mxu0 0
        %709 = vmatpush2.bf16.msra.mxu0 0
        %710 = vmatprep.subr.bf16.mxu0 0
        %711 = vmatpush2.bf16.msra.mxu0 0
        %712 = vmatprep.subr.bf16.mxu0 0
        %713 = vmatpush2.bf16.msra.mxu0 0
        %714 = vmatprep.subr.bf16.mxu0 0
        %715 = vmatpush2.bf16.msra.mxu0 0
        %716 = vmatprep.subr.bf16.mxu0 0
        %717 = vmatpush2.bf16.msra.mxu0 0
        %718 = vmatprep.subr.bf16.mxu0 0
        %719 = vmatpush2.bf16.msra.mxu0 0
        %720 = vmatprep.mubr.bf16.mxu0 0
        %721 = vmatmul.mubr.bf16.gmra.mxu0 %v682
        %v722 = vpop.f32.mrf.mxu0
        %v723 = vadd.f32 0.0, %v722
        %v724 = vpop.f32.mrf.mxu0
        %v725 = vpop.f32.mrf.mxu0
        %v726 = vpop.f32.mrf.mxu0
        %727 = vdwg.mxu0
        %728 = vrot.lane.b32.xlu0 %v433, 64
        %v729 = vpop.permute.xlu0 %728
        %v731 = vsel %vm440, %v676, 0
        %v734 = vsel %vm684, %v729, 0
        %736 = vmatprep.subr.bf16.mxu0 0
        %737 = vmatpush1.bf16.msra.mxu0 0
        %738 = vmatprep.subr.bf16.mxu0 0
        %739 = vmatpush1.bf16.msra.mxu0 0
        %740 = vmatprep.subr.bf16.mxu0 0
        %741 = vmatpush1.bf16.msra.mxu0 0
        %742 = vmatprep.subr.bf16.mxu0 0
        %743 = vmatpush1.bf16.msra.mxu0 0
        %744 = vmatprep.subr.bf16.mxu0 0
        %745 = vmatpush1.bf16.msra.mxu0 0
        %746 = vmatprep.subr.bf16.mxu0 0
        %747 = vmatpush1.bf16.msra.mxu0 0
        %748 = vmatprep.subr.bf16.mxu0 0
        %749 = vmatpush1.bf16.msra.mxu0 0
        %750 = vmatprep.subr.bf16.mxu0 0
        %751 = vmatpush1.bf16.msra.mxu0 %v734
        %752 = vmatprep.subr.bf16.mxu0 0
        %753 = vmatpush2.bf16.msra.mxu0 0
        %754 = vmatprep.subr.bf16.mxu0 0
        %755 = vmatpush2.bf16.msra.mxu0 0
        %756 = vmatprep.subr.bf16.mxu0 0
        %757 = vmatpush2.bf16.msra.mxu0 0
        %758 = vmatprep.subr.bf16.mxu0 0
        %759 = vmatpush2.bf16.msra.mxu0 0
        %760 = vmatprep.subr.bf16.mxu0 0
        %761 = vmatpush2.bf16.msra.mxu0 0
        %762 = vmatprep.subr.bf16.mxu0 0
        %763 = vmatpush2.bf16.msra.mxu0 0
        %764 = vmatprep.subr.bf16.mxu0 0
        %765 = vmatpush2.bf16.msra.mxu0 0
        %766 = vmatprep.subr.bf16.mxu0 0
        %767 = vmatpush2.bf16.msra.mxu0 0
        %768 = vmatprep.mubr.bf16.mxu0 0
        %769 = vmatmul.mubr.bf16.gmra.mxu0 %v731
        %v770 = vpop.f32.mrf.mxu0
        %v771 = vadd.f32 0.0, %v770
        %v772 = vpop.f32.mrf.mxu0
        %v773 = vpop.f32.mrf.mxu0
        %v774 = vpop.f32.mrf.mxu0
        %775 = vdwg.mxu0
        %776 = vrot.lane.b32.xlu0 %v435, 64
        %v777 = vpop.permute.xlu0 %776
        %v779 = vsel %vm440, %v677, 0
        %v782 = vsel %vm684, %v777, 0
        %784 = vmatprep.subr.bf16.mxu0 0
        %785 = vmatpush1.bf16.msra.mxu0 0
        %786 = vmatprep.subr.bf16.mxu0 0
        %787 = vmatpush1.bf16.msra.mxu0 0
        %788 = vmatprep.subr.bf16.mxu0 0
        %789 = vmatpush1.bf16.msra.mxu0 0
        %790 = vmatprep.subr.bf16.mxu0 0
        %791 = vmatpush1.bf16.msra.mxu0 0
        %792 = vmatprep.subr.bf16.mxu0 0
        %793 = vmatpush1.bf16.msra.mxu0 0
        %794 = vmatprep.subr.bf16.mxu0 0
        %795 = vmatpush1.bf16.msra.mxu0 0
        %796 = vmatprep.subr.bf16.mxu0 0
        %797 = vmatpush1.bf16.msra.mxu0 0
        %798 = vmatprep.subr.bf16.mxu0 0
        %799 = vmatpush1.bf16.msra.mxu0 %v782
        %800 = vmatprep.subr.bf16.mxu0 0
        %801 = vmatpush2.bf16.msra.mxu0 0
        %802 = vmatprep.subr.bf16.mxu0 0
        %803 = vmatpush2.bf16.msra.mxu0 0
        %804 = vmatprep.subr.bf16.mxu0 0
        %805 = vmatpush2.bf16.msra.mxu0 0
        %806 = vmatprep.subr.bf16.mxu0 0
        %807 = vmatpush2.bf16.msra.mxu0 0
        %808 = vmatprep.subr.bf16.mxu0 0
        %809 = vmatpush2.bf16.msra.mxu0 0
        %810 = vmatprep.subr.bf16.mxu0 0
        %811 = vmatpush2.bf16.msra.mxu0 0
        %812 = vmatprep.subr.bf16.mxu0 0
        %813 = vmatpush2.bf16.msra.mxu0 0
        %814 = vmatprep.subr.bf16.mxu0 0
        %815 = vmatpush2.bf16.msra.mxu0 0
        %816 = vmatprep.mubr.bf16.mxu0 0
        %817 = vmatmul.mubr.bf16.gmra.mxu0 %v779
        %v818 = vpop.f32.mrf.mxu0
        %v819 = vadd.f32 0.0, %v818
        %v820 = vpop.f32.mrf.mxu0
        %v821 = vpop.f32.mrf.mxu0
        %v822 = vpop.f32.mrf.mxu0
        %823 = vdwg.mxu0
        %824 = vrot.lane.b32.xlu0 %v437, 64
        %v825 = vpop.permute.xlu0 %824
        %v827 = vsel %vm440, %v678, 0
        %v830 = vsel %vm684, %v825, 0
        %832 = vmatprep.subr.bf16.mxu0 0
        %833 = vmatpush1.bf16.msra.mxu0 0
        %834 = vmatprep.subr.bf16.mxu0 0
        %835 = vmatpush1.bf16.msra.mxu0 0
        %836 = vmatprep.subr.bf16.mxu0 0
        %837 = vmatpush1.bf16.msra.mxu0 0
        %838 = vmatprep.subr.bf16.mxu0 0
        %839 = vmatpush1.bf16.msra.mxu0 0
        %840 = vmatprep.subr.bf16.mxu0 0
        %841 = vmatpush1.bf16.msra.mxu0 0
        %842 = vmatprep.subr.bf16.mxu0 0
        %843 = vmatpush1.bf16.msra.mxu0 0
        %844 = vmatprep.subr.bf16.mxu0 0
        %845 = vmatpush1.bf16.msra.mxu0 0
        %846 = vmatprep.subr.bf16.mxu0 0
        %847 = vmatpush1.bf16.msra.mxu0 %v830
        %848 = vmatprep.subr.bf16.mxu0 0
        %849 = vmatpush2.bf16.msra.mxu0 0
        %850 = vmatprep.subr.bf16.mxu0 0
        %851 = vmatpush2.bf16.msra.mxu0 0
        %852 = vmatprep.subr.bf16.mxu0 0
        %853 = vmatpush2.bf16.msra.mxu0 0
        %854 = vmatprep.subr.bf16.mxu0 0
        %855 = vmatpush2.bf16.msra.mxu0 0
        %856 = vmatprep.subr.bf16.mxu0 0
        %857 = vmatpush2.bf16.msra.mxu0 0
        %858 = vmatprep.subr.bf16.mxu0 0
        %859 = vmatpush2.bf16.msra.mxu0 0
        %860 = vmatprep.subr.bf16.mxu0 0
        %861 = vmatpush2.bf16.msra.mxu0 0
        %862 = vmatprep.subr.bf16.mxu0 0
        %863 = vmatpush2.bf16.msra.mxu0 0
        %864 = vmatprep.mubr.bf16.mxu0 0
        %865 = vmatmul.mubr.bf16.gmra.mxu0 %v827
        %v866 = vpop.f32.mrf.mxu0
        %v867 = vadd.f32 0.0, %v866
        %v868 = vpop.f32.mrf.mxu0
        %v869 = vpop.f32.mrf.mxu0
        %v870 = vpop.f32.mrf.mxu0
        %871 = vdwg.mxu0
        %v872 = vpack.c.bf16 %v723, %v723
        %v873 = vpack.c.bf16 %v771, %v771
        %v874 = vpack.c.bf16 %v819, %v819
        %v875 = vpack.c.bf16 %v867, %v867
        %v876 = vld [vmem:[%s2] sm:$0xf]
        %s877 = scalar_lea.vmem %s2, 4
        %v878 = vld [vmem:[%s877] sm:$0xf]
        %v880 = vsel %vm440, %v873, 0
        %v883 = vsel %vm684, %v878, 0
        %885 = vmatprep.subr.bf16.mxu0 0
        %886 = vmatpush1.bf16.msra.mxu0 0
        %887 = vmatprep.subr.bf16.mxu0 0
        %888 = vmatpush1.bf16.msra.mxu0 0
        %889 = vmatprep.subr.bf16.mxu0 0
        %890 = vmatpush1.bf16.msra.mxu0 0
        %891 = vmatprep.subr.bf16.mxu0 0
        %892 = vmatpush1.bf16.msra.mxu0 0
        %893 = vmatprep.subr.bf16.mxu0 0
        %894 = vmatpush1.bf16.msra.mxu0 0
        %895 = vmatprep.subr.bf16.mxu0 0
        %896 = vmatpush1.bf16.msra.mxu0 0
        %897 = vmatprep.subr.bf16.mxu0 0
        %898 = vmatpush1.bf16.msra.mxu0 0
        %899 = vmatprep.subr.bf16.mxu0 0
        %900 = vmatpush1.bf16.msra.mxu0 %v883
        %901 = vmatprep.subr.bf16.mxu0 0
        %902 = vmatpush2.bf16.msra.mxu0 0
        %903 = vmatprep.subr.bf16.mxu0 0
        %904 = vmatpush2.bf16.msra.mxu0 0
        %905 = vmatprep.subr.bf16.mxu0 0
        %906 = vmatpush2.bf16.msra.mxu0 0
        %907 = vmatprep.subr.bf16.mxu0 0
        %908 = vmatpush2.bf16.msra.mxu0 0
        %909 = vmatprep.subr.bf16.mxu0 0
        %910 = vmatpush2.bf16.msra.mxu0 0
        %911 = vmatprep.subr.bf16.mxu0 0
        %912 = vmatpush2.bf16.msra.mxu0 0
        %913 = vmatprep.subr.bf16.mxu0 0
        %914 = vmatpush2.bf16.msra.mxu0 0
        %915 = vmatprep.subr.bf16.mxu0 0
        %916 = vmatpush2.bf16.msra.mxu0 0
        %917 = vmatprep.mubr.bf16.mxu0 0
        %918 = vmatmul.mubr.bf16.gmra.mxu0 %v880
        %v919 = vpop.f32.mrf.mxu0
        %v920 = vadd.f32 0.0, %v919
        %v921 = vpop.f32.mrf.mxu0
        %v922 = vpop.f32.mrf.mxu0
        %v923 = vpop.f32.mrf.mxu0
        %924 = vdwg.mxu0
        %v926 = vsel %vm440, %v872, 0
        %v929 = vsel %vm684, %v876, 0
        %931 = vmatprep.subr.bf16.mxu0 0
        %932 = vmatpush1.bf16.msra.mxu0 0
        %933 = vmatprep.subr.bf16.mxu0 0
        %934 = vmatpush1.bf16.msra.mxu0 0
        %935 = vmatprep.subr.bf16.mxu0 0
        %936 = vmatpush1.bf16.msra.mxu0 0
        %937 = vmatprep.subr.bf16.mxu0 0
        %938 = vmatpush1.bf16.msra.mxu0 0
        %939 = vmatprep.subr.bf16.mxu0 0
        %940 = vmatpush1.bf16.msra.mxu0 0
        %941 = vmatprep.subr.bf16.mxu0 0
        %942 = vmatpush1.bf16.msra.mxu0 0
        %943 = vmatprep.subr.bf16.mxu0 0
        %944 = vmatpush1.bf16.msra.mxu0 0
        %945 = vmatprep.subr.bf16.mxu0 0
        %946 = vmatpush1.bf16.msra.mxu0 %v929
        %947 = vmatprep.subr.bf16.mxu0 0
        %948 = vmatpush2.bf16.msra.mxu0 0
        %949 = vmatprep.subr.bf16.mxu0 0
        %950 = vmatpush2.bf16.msra.mxu0 0
        %951 = vmatprep.subr.bf16.mxu0 0
        %952 = vmatpush2.bf16.msra.mxu0 0
        %953 = vmatprep.subr.bf16.mxu0 0
        %954 = vmatpush2.bf16.msra.mxu0 0
        %955 = vmatprep.subr.bf16.mxu0 0
        %956 = vmatpush2.bf16.msra.mxu0 0
        %957 = vmatprep.subr.bf16.mxu0 0
        %958 = vmatpush2.bf16.msra.mxu0 0
        %959 = vmatprep.subr.bf16.mxu0 0
        %960 = vmatpush2.bf16.msra.mxu0 0
        %961 = vmatprep.subr.bf16.mxu0 0
        %962 = vmatpush2.bf16.msra.mxu0 0
        %963 = vmatprep.mubr.bf16.mxu0 0
        %964 = vmatmul.mubr.bf16.gmra.mxu0 %v926
        %v965 = vpop.f32.mrf.mxu0
        %v966 = vadd.f32 %v920, %v965
        %v967 = vpop.f32.mrf.mxu0
        %v968 = vpop.f32.mrf.mxu0
        %v969 = vpop.f32.mrf.mxu0
        %970 = vdwg.mxu0
        %s971 = scalar_lea.vmem %s2, 8
        %v972 = vld [vmem:[%s971] sm:$0xf]
        %v974 = vsel %vm440, %v874, 0
        %v977 = vsel %vm684, %v972, 0
        %979 = vmatprep.subr.bf16.mxu0 0
        %980 = vmatpush1.bf16.msra.mxu0 0
        %981 = vmatprep.subr.bf16.mxu0 0
        %982 = vmatpush1.bf16.msra.mxu0 0
        %983 = vmatprep.subr.bf16.mxu0 0
        %984 = vmatpush1.bf16.msra.mxu0 0
        %985 = vmatprep.subr.bf16.mxu0 0
        %986 = vmatpush1.bf16.msra.mxu0 0
        %987 = vmatprep.subr.bf16.mxu0 0
        %988 = vmatpush1.bf16.msra.mxu0 0
        %989 = vmatprep.subr.bf16.mxu0 0
        %990 = vmatpush1.bf16.msra.mxu0 0
        %991 = vmatprep.subr.bf16.mxu0 0
        %992 = vmatpush1.bf16.msra.mxu0 0
        %993 = vmatprep.subr.bf16.mxu0 0
        %994 = vmatpush1.bf16.msra.mxu0 %v977
        %995 = vmatprep.subr.bf16.mxu0 0
        %996 = vmatpush2.bf16.msra.mxu0 0
        %997 = vmatprep.subr.bf16.mxu0 0
        %998 = vmatpush2.bf16.msra.mxu0 0
        %999 = vmatprep.subr.bf16.mxu0 0
        %1000 = vmatpush2.bf16.msra.mxu0 0
        %1001 = vmatprep.subr.bf16.mxu0 0
        %1002 = vmatpush2.bf16.msra.mxu0 0
        %1003 = vmatprep.subr.bf16.mxu0 0
        %1004 = vmatpush2.bf16.msra.mxu0 0
        %1005 = vmatprep.subr.bf16.mxu0 0
        %1006 = vmatpush2.bf16.msra.mxu0 0
        %1007 = vmatprep.subr.bf16.mxu0 0
        %1008 = vmatpush2.bf16.msra.mxu0 0
        %1009 = vmatprep.subr.bf16.mxu0 0
        %1010 = vmatpush2.bf16.msra.mxu0 0
        %1011 = vmatprep.mubr.bf16.mxu0 0
        %1012 = vmatmul.mubr.bf16.gmra.mxu0 %v974
        %v1013 = vpop.f32.mrf.mxu0
        %v1014 = vadd.f32 0.0, %v1013
        %v1015 = vpop.f32.mrf.mxu0
        %v1016 = vpop.f32.mrf.mxu0
        %v1017 = vpop.f32.mrf.mxu0
        %1018 = vdwg.mxu0
        %v1019 = vadd.f32 %v966, %v1014
        %s1020 = scalar_lea.vmem %s2, 12
        %v1021 = vld [vmem:[%s1020] sm:$0xf]
        %v1023 = vsel %vm440, %v875, 0
        %v1026 = vsel %vm684, %v1021, 0
        %1028 = vmatprep.subr.bf16.mxu0 0
        %1029 = vmatpush1.bf16.msra.mxu0 0
        %1030 = vmatprep.subr.bf16.mxu0 0
        %1031 = vmatpush1.bf16.msra.mxu0 0
        %1032 = vmatprep.subr.bf16.mxu0 0
        %1033 = vmatpush1.bf16.msra.mxu0 0
        %1034 = vmatprep.subr.bf16.mxu0 0
        %1035 = vmatpush1.bf16.msra.mxu0 0
        %1036 = vmatprep.subr.bf16.mxu0 0
        %1037 = vmatpush1.bf16.msra.mxu0 0
        %1038 = vmatprep.subr.bf16.mxu0 0
        %1039 = vmatpush1.bf16.msra.mxu0 0
        %1040 = vmatprep.subr.bf16.mxu0 0
        %1041 = vmatpush1.bf16.msra.mxu0 0
        %1042 = vmatprep.subr.bf16.mxu0 0
        %1043 = vmatpush1.bf16.msra.mxu0 %v1026
        %1044 = vmatprep.subr.bf16.mxu0 0
        %1045 = vmatpush2.bf16.msra.mxu0 0
        %1046 = vmatprep.subr.bf16.mxu0 0
        %1047 = vmatpush2.bf16.msra.mxu0 0
        %1048 = vmatprep.subr.bf16.mxu0 0
        %1049 = vmatpush2.bf16.msra.mxu0 0
        %1050 = vmatprep.subr.bf16.mxu0 0
        %1051 = vmatpush2.bf16.msra.mxu0 0
        %1052 = vmatprep.subr.bf16.mxu0 0
        %1053 = vmatpush2.bf16.msra.mxu0 0
        %1054 = vmatprep.subr.bf16.mxu0 0
        %1055 = vmatpush2.bf16.msra.mxu0 0
        %1056 = vmatprep.subr.bf16.mxu0 0
        %1057 = vmatpush2.bf16.msra.mxu0 0
        %1058 = vmatprep.subr.bf16.mxu0 0
        %1059 = vmatpush2.bf16.msra.mxu0 0
        %1060 = vmatprep.mubr.bf16.mxu0 0
        %1061 = vmatmul.mubr.bf16.gmra.mxu0 %v1023
        %v1062 = vpop.f32.mrf.mxu0
        %v1063 = vadd.f32 0.0, %v1062
        %v1064 = vpop.f32.mrf.mxu0
        %v1065 = vpop.f32.mrf.mxu0
        %v1066 = vpop.f32.mrf.mxu0
        %1067 = vdwg.mxu0
        %v1068 = vadd.f32 %v1019, %v1063
        %v1069 = vadd.f32 %v329, %v1068
        %v1070 = vld [vmem:[%s7] sm:$0x1]
        %v1071 = vld [vmem:[%s8] sm:$0x1]
        %v1072 = vsel %vm332, %v1069, 0.0
        %1073 = vadd.xlane.f32.xlu0 %v1072
        %v1074 = vpop.xlane.xlu0 %1073
        %v1075 = vmul.f32 %v1074, %v336
        %v1076 = vsub.f32 %v1069, %v1075
        %v1077 = vmul.f32 %v1076, %v1076
        %v1078 = vsel %vm332, %v1077, 0.0
        %1079 = vadd.xlane.f32.xlu0 %v1078
        %v1080 = vpop.xlane.xlu0 %1079
        %v1081 = vmul.f32 %v1080, %v336
        %v1082 = vadd.f32 %v1081, 1e-05
        %v1083 = vrsqrt.pop %v1082
        %v1084 = vmul.f32 %v1076, %v1083
        %v1086 = vlaneseq
        %v1087 = vshrl.u32 %v1086, 7
        %v1088 = vsub.s32 0, %v1087
        %v1089 = vrot.slane %v1070, %v1088
        %v1091 = vmul.f32 %v1084, %v1089
        %v1093 = vlaneseq
        %v1094 = vshrl.u32 %v1093, 7
        %v1095 = vsub.s32 0, %v1094
        %v1096 = vrot.slane %v1071, %v1095
        %v1098 = vadd.f32 %v1091, %v1096
        %v1099 = vpack.c.bf16 %v1098, %v1098
        %v1100 = vld [vmem:[%s5] sm:$0xf]
        %v1101 = vld [vmem:[%s5 + $0x4] sm:$0xf]
        %v1102 = vld [vmem:[%s5 + $0x8] sm:$0xf]
        %v1103 = vld [vmem:[%s5 + $0xc] sm:$0xf]
        %v1108 = vunpack.c.l.b16 %v1100
        %v1109 = vunpack.c.l.b16 %v1101
        %v1110 = vunpack.c.l.b16 %v1102
        %v1111 = vunpack.c.l.b16 %v1103
        %v1112 = vpack.c.b16 %v1109, %v1108
        %v1113 = vpack.c.b16 %v1111, %v1110
        %v1117 = vsel %vm332, %v1099, 0
        %1119 = vmatprep.subr.bf16.mxu0 0
        %1120 = vmatpush1.bf16.msra.mxu0 0
        %1121 = vmatprep.subr.bf16.mxu0 0
        %1122 = vmatpush1.bf16.msra.mxu0 0
        %1123 = vmatprep.subr.bf16.mxu0 0
        %1124 = vmatpush1.bf16.msra.mxu0 0
        %1125 = vmatprep.subr.bf16.mxu0 0
        %1126 = vmatpush1.bf16.msra.mxu0 0
        %1127 = vmatprep.subr.bf16.mxu0 0
        %1128 = vmatpush1.bf16.msra.mxu0 0
        %1129 = vmatprep.subr.bf16.mxu0 0
        %1130 = vmatpush1.bf16.msra.mxu0 0
        %1131 = vmatprep.subr.bf16.mxu0 0
        %1132 = vmatpush1.bf16.msra.mxu0 %v1113
        %1133 = vmatprep.subr.bf16.mxu0 0
        %1134 = vmatpush1.bf16.msra.mxu0 %v1112
        %1135 = vmatprep.subr.bf16.mxu0 0
        %1136 = vmatpush2.bf16.msra.mxu0 0
        %1137 = vmatprep.subr.bf16.mxu0 0
        %1138 = vmatpush2.bf16.msra.mxu0 0
        %1139 = vmatprep.subr.bf16.mxu0 0
        %1140 = vmatpush2.bf16.msra.mxu0 0
        %1141 = vmatprep.subr.bf16.mxu0 0
        %1142 = vmatpush2.bf16.msra.mxu0 0
        %1143 = vmatprep.subr.bf16.mxu0 0
        %1144 = vmatpush2.bf16.msra.mxu0 0
        %1145 = vmatprep.subr.bf16.mxu0 0
        %1146 = vmatpush2.bf16.msra.mxu0 0
        %1147 = vmatprep.subr.bf16.mxu0 0
        %1148 = vmatpush2.bf16.msra.mxu0 0
        %1149 = vmatprep.subr.bf16.mxu0 0
        %1150 = vmatpush2.bf16.msra.mxu0 0
        %1151 = vmatprep.mubr.bf16.mxu0 0
        %1152 = vmatmul.mubr.bf16.gmra.mxu0 %v1117
        %v1153 = vpop.f32.mrf.mxu0
        %v1154 = vadd.f32 0.0, %v1153
        %v1155 = vpop.f32.mrf.mxu0
        %v1156 = vpop.f32.mrf.mxu0
        %v1157 = vpop.f32.mrf.mxu0
        %1158 = vdwg.mxu0
        %v1159 = vmul.f32 %v1154, 0.5
        %v1160 = vmul.f32 %v1154, 0.70710677
        %v1161 = verf.f32.pop %v1160
        %v1162 = vadd.f32 %v1161, 1.0
        %v1163 = vmul.f32 %v1159, %v1162
        %v1164 = vpack.c.bf16 %v1163, %v1163
        %v1165 = vld [vmem:[%s6] sm:$0xf]
        %v1166 = vld [vmem:[%s6 + $0x4] sm:$0xf]
        %v1167 = vld [vmem:[%s6 + $0x8] sm:$0xf]
        %v1168 = vld [vmem:[%s6 + $0xc] sm:$0xf]
        %v1169 = vld [vmem:[%s6 + $0x10] sm:$0xf]
        %v1170 = vld [vmem:[%s6 + $0x14] sm:$0xf]
        %v1171 = vld [vmem:[%s6 + $0x18] sm:$0xf]
        %v1172 = vld [vmem:[%s6 + $0x1c] sm:$0xf]
        %v1173 = vld [vmem:[%s6 + $0x20] sm:$0xf]
        %v1174 = vld [vmem:[%s6 + $0x24] sm:$0xf]
        %v1175 = vld [vmem:[%s6 + $0x28] sm:$0xf]
        %v1176 = vld [vmem:[%s6 + $0x2c] sm:$0xf]
        %v1177 = vld [vmem:[%s6 + $0x30] sm:$0xf]
        %v1178 = vld [vmem:[%s6 + $0x34] sm:$0xf]
        %v1179 = vld [vmem:[%s6 + $0x38] sm:$0xf]
        %v1180 = vld [vmem:[%s6 + $0x3c] sm:$0xf]
        %v1197 = vunpack.c.l.b16 %v1165
        %v1198 = vunpack.c.l.b16 %v1166
        %v1199 = vunpack.c.l.b16 %v1167
        %v1200 = vunpack.c.l.b16 %v1168
        %v1201 = vunpack.c.l.b16 %v1169
        %v1202 = vunpack.c.l.b16 %v1170
        %v1203 = vunpack.c.l.b16 %v1171
        %v1204 = vunpack.c.l.b16 %v1172
        %v1205 = vunpack.c.l.b16 %v1173
        %v1206 = vunpack.c.l.b16 %v1174
        %v1207 = vunpack.c.l.b16 %v1175
        %v1208 = vunpack.c.l.b16 %v1176
        %v1209 = vunpack.c.l.b16 %v1177
        %v1210 = vunpack.c.l.b16 %v1178
        %v1211 = vunpack.c.l.b16 %v1179
        %v1212 = vunpack.c.l.b16 %v1180
        %v1213 = vpack.c.b16 %v1198, %v1197
        %v1214 = vpack.c.b16 %v1200, %v1199
        %v1215 = vpack.c.b16 %v1202, %v1201
        %v1216 = vpack.c.b16 %v1204, %v1203
        %v1217 = vpack.c.b16 %v1206, %v1205
        %v1218 = vpack.c.b16 %v1208, %v1207
        %v1219 = vpack.c.b16 %v1210, %v1209
        %v1220 = vpack.c.b16 %v1212, %v1211
        %1229 = vmatprep.subr.bf16.mxu0 0
        %1230 = vmatpush1.bf16.msra.mxu0 %v1220
        %1231 = vmatprep.subr.bf16.mxu0 0
        %1232 = vmatpush1.bf16.msra.mxu0 %v1219
        %1233 = vmatprep.subr.bf16.mxu0 0
        %1234 = vmatpush1.bf16.msra.mxu0 %v1218
        %1235 = vmatprep.subr.bf16.mxu0 0
        %1236 = vmatpush1.bf16.msra.mxu0 %v1217
        %1237 = vmatprep.subr.bf16.mxu0 0
        %1238 = vmatpush1.bf16.msra.mxu0 %v1216
        %1239 = vmatprep.subr.bf16.mxu0 0
        %1240 = vmatpush1.bf16.msra.mxu0 %v1215
        %1241 = vmatprep.subr.bf16.mxu0 0
        %1242 = vmatpush1.bf16.msra.mxu0 %v1214
        %1243 = vmatprep.subr.bf16.mxu0 0
        %1244 = vmatpush1.bf16.msra.mxu0 %v1213
        %1245 = vmatprep.subr.bf16.mxu0 0
        %1246 = vmatpush2.bf16.msra.mxu0 0
        %1247 = vmatprep.subr.bf16.mxu0 0
        %1248 = vmatpush2.bf16.msra.mxu0 0
        %1249 = vmatprep.subr.bf16.mxu0 0
        %1250 = vmatpush2.bf16.msra.mxu0 0
        %1251 = vmatprep.subr.bf16.mxu0 0
        %1252 = vmatpush2.bf16.msra.mxu0 0
        %1253 = vmatprep.subr.bf16.mxu0 0
        %1254 = vmatpush2.bf16.msra.mxu0 0
        %1255 = vmatprep.subr.bf16.mxu0 0
        %1256 = vmatpush2.bf16.msra.mxu0 0
        %1257 = vmatprep.subr.bf16.mxu0 0
        %1258 = vmatpush2.bf16.msra.mxu0 0
        %1259 = vmatprep.subr.bf16.mxu0 0
        %1260 = vmatpush2.bf16.msra.mxu0 0
        %1261 = vmatprep.mubr.bf16.mxu0 0
        %1262 = vmatmul.mubr.bf16.gmra.mxu0 %v1164
        %v1263 = vpop.f32.mrf.mxu0
        %v1264 = vadd.f32 0.0, %v1263
        %v1265 = vpop.f32.mrf.mxu0
        %v1266 = vpop.f32.mrf.mxu0
        %v1267 = vpop.f32.mrf.mxu0
        %1268 = vdwg.mxu0
        %v1269 = vadd.f32 %v1069, %v1264
        %1270 = vst.msk [vmem:[%s323] sm:$0xff] %vm332, %v1269
        %s1271 = sand.u32 %s225, 1
        %s1272 = scalar_lea.sflag [#allocation3], %s1271
        %s1273 = sand.u32 %s225, 1
        %s1274 = smul.addr %s1273, 8
        %s1275 = scalar_lea.vmem [#allocation2], %s1274
        // Predicated region
        $region57: #{tpu_custom_call.1} parent=55 // pred_check
          %p1276 = pneg %p235
        $region58: #{tpu_custom_call.1} parent=55 // pred_check_branch
          %1278 = sbr.rel (%p1276) target = $region60
        $region59: #{tpu_custom_call.1} parent=55 // pred_region
          %s1280 = ssub.s32 128, 128
          %1281 = vsyncadd %s1272, %s1280
          %s1282 = smul.addr %s23, 128
          %s1283 = scalar_lea.hbm %s9, %s1282
          %s1285 = sshll.u32 %s1275, 4
          %s1286 = int_to_ptr.vmem [resolvable:$true] %s1285
          %1288 = dma.vmem_to_hbm [thread:$0]  %s1286, 128, %s1283, %s1272
        $region60: #{tpu_custom_call.1} parent=55 // pred_fallthru
          _
      $region56: #{tpu_custom_call.1} parent=5 // pred_fallthru
        _
      %p1289 = scmp.le.s32.totalorder 2, %s18
      // Predicated region
      $region61: #{tpu_custom_call.1} parent=5 // pred_check
        %p1290 = pneg %p1289
      $region62: #{tpu_custom_call.1} parent=5 // pred_check_branch
        %1292 = sbr.rel (%p1290) target = $region64
      $region63: #{tpu_custom_call.1} parent=5 // pred_region
        %s1293 = ssub.s32 %s18, 2
        // Predicated region
        $region65: #{tpu_custom_call.1} parent=63 // pred_check
          %p1294 = pneg %p241
        $region66: #{tpu_custom_call.1} parent=63 // pred_check_branch
          %1296 = sbr.rel (%p1294) target = $region68
        $region67: #{tpu_custom_call.1} parent=63 // pred_region
          %s1297 = sand.u32 %s226, 1
          %s1298 = scalar_lea.sflag [#allocation3], %s1297
          %s1299 = sand.u32 %s226, 1
          %s1300 = smul.addr %s1299, 8
          %s1301 = scalar_lea.vmem [#allocation2], %s1300
          %1302 = dma.done %s1298, 128
        $region68: #{tpu_custom_call.1} parent=63 // pred_fallthru
          _
      $region64: #{tpu_custom_call.1} parent=5 // pred_fallthru
        _
    $region6: #{tpu_custom_call.1} parent=1 // loop_footer
      %s22 = sadd.s32 1, %s18
    $region7: #{tpu_custom_call.1} parent=1 // loop_footer_branch
      %17 = sbr.rel target = $region3
    $region8: #{tpu_custom_call.1} parent=1 // loop_exit
      _
    %1303 = vsyncpa [#allocation3], 1
    %s1304 = scalar_lea.sflag [#allocation3], 1
    %1305 = vsyncpa %s1304, 1

</llo_original>
